<compile_context>
chip_gen: v5e
topology: v5e:2x2
jax: 0.10.0
libtpu: 0.0.40
codegen_flags: <defaults>
</compile_context>

<pallas_src>
import math

import jax
import jax.numpy as jnp
from jax.experimental import pallas as pl
from jax.experimental.pallas import tpu as pltpu


# ----------------------------- Pallas kernel ---------------------------------

def _make_fused_bilstm_kernel(T, Bp, H, num_layers):
    """Fused multi-layer bidirectional LSTM + Linear head.

    Inputs (refs, all whole-array VMEM blocks):
      x_f   : (T*Bp, I)   time-major input slab (row block t = x(t))
      x_r   : (T*Bp, I)   time-reversed slab    (row block t = x(T-1-t))
      per layer l (6 refs):
        Wa_l  : (in_l, 8H)  packed input->gates weights consuming the forward-ordered slab
        Wb_l  : (in_l, 8H)  packed input->gates weights consuming the reversed slab
        Whh_l : (2H, 8H)    block-diagonal hidden->gates weights for [h_f | h_b]
        b_l   : (1, 8H)     packed bias (b_ih + b_hh, both directions)
        h0_l  : (Bp, 2H)    [h0_f | h0_b]
        c0_l  : (Bp, 2H)    [c0_f | c0_b]
      lin_w : (H, O)      final Linear weight (pre-transposed)
      lin_b : (1, O)      final Linear bias
    Output:
      pred  : (Bp, O)     Linear(0.5*(h_fwd + h_bwd) at t = T-1) of the last layer
    Scratch:
      gin   : (T*Bp, 8H)  hoisted packed input projection (reused across layers)

    Packed gate column order (each slice H wide):
      [i_f, i_b, f_f, f_b, o_f, o_b, g_f, g_b]
    """

    def kernel(*refs):
        n_layer_refs = 6 * num_layers
        xf_ref, xr_ref = refs[0], refs[1]
        layer_refs = refs[2:2 + n_layer_refs]
        lw_ref = refs[2 + n_layer_refs]
        lb_ref = refs[3 + n_layer_refs]
        pred_ref = refs[4 + n_layer_refs]
        gin_sc = refs[5 + n_layer_refs]

        x_f = xf_ref[...]                         # forward-time-ordered input slab
        x_r = xr_ref[...]                         # reverse-time-ordered input slab
        head_h = None

        for l in range(num_layers):
            wa_ref, wb_ref, whh_ref, b_ref, h0_ref, c0_ref = layer_refs[6 * l:6 * l + 6]

            # ---- hoisted packed input projection: both directions in one pass ----
            gin_sc[...] = (
                jnp.dot(x_f, wa_ref[...], preferred_element_type=jnp.float32)
                + jnp.dot(x_r, wb_ref[...], preferred_element_type=jnp.float32)
                + b_ref[...])

            whh = whh_ref[...]                    # hoisted out of the time loop
            h = h0_ref[...]                       # (Bp, 2H) = [h_f | h_b]
            c = c0_ref[...]                       # (Bp, 2H) = [c_f | c_b]
            hs = [None] * T                       # hs[t] = [h_f(time t) | h_b(time T-1-t)]

            # ---- fused serial recurrence: both directions in one block-diag matmul ----
            for t in range(T):
                r = t * Bp
                gates = gin_sc[r:r + Bp, :] + jnp.dot(
                    h, whh, preferred_element_type=jnp.float32)      # (Bp, 8H)
                sig = jax.nn.sigmoid(gates[:, 0:6 * H])              # i,f,o for both dirs
                g = jnp.tanh(gates[:, 6 * H:8 * H])                  # g for both dirs
                c = sig[:, 2 * H:4 * H] * c + sig[:, 0:2 * H] * g
                h = sig[:, 4 * H:6 * H] * jnp.tanh(c)
                hs[t] = h

            if l < num_layers - 1:
                # batched inter-layer handoff (sublane-aligned concat only, no masked stores)
                x_f = jnp.concatenate(hs, axis=0)          # row block t = [hf(t)|hb(T-1-t)]
                x_r = jnp.concatenate(hs[::-1], axis=0)    # row block t = [hf(T-1-t)|hb(t)]
            else:
                # direction-mean at the last timestep
                head_h = 0.5 * (hs[T - 1][:, 0:H] + hs[0][:, H:2 * H])

        # ---- fused Linear head (last layer only) ----
        pred_ref[...] = (jnp.dot(head_h, lw_ref[...],
                                 preferred_element_type=jnp.float32) + lb_ref[...])

    return kernel


# ----------------------------- parameter packing (done once) ------------------

def pack_bilstm_params(lstm_params, lin_w, lin_b, hidden_size, num_layers):
    """Pre-packs PyTorch-layout LSTM weights into the kernel's fused layout."""
    H = hidden_size

    def gate_cols(w):
        # w: (4H, in) torch layout -> dict of (in, H) per gate, torch gate order i,f,g,o
        wt = jnp.transpose(w).astype(jnp.float32)
        return dict(i=wt[:, 0:H], f=wt[:, H:2 * H],
                    g=wt[:, 2 * H:3 * H], o=wt[:, 3 * H:4 * H])

    def fwd_slots(c, rows):   # place gates of the forward direction, zeros in bwd slots
        z = jnp.zeros((rows, H), jnp.float32)
        return jnp.concatenate([c['i'], z, c['f'], z, c['o'], z, c['g'], z], axis=1)

    def bwd_slots(c, rows):   # place gates of the backward direction, zeros in fwd slots
        z = jnp.zeros((rows, H), jnp.float32)
        return jnp.concatenate([z, c['i'], z, c['f'], z, c['o'], z, c['g']], axis=1)

    packed = []
    for l in range(num_layers):
        pf, pb = lstm_params[2 * l], lstm_params[2 * l + 1]
        in_sz = pf["wih"].shape[1]
        cf_ih, cb_ih = gate_cols(pf["wih"]), gate_cols(pb["wih"])

        if l == 0:
            # layer 0: forward slab carries x(t), reversed slab carries x(T-1-t)
            Wa = fwd_slots(cf_ih, in_sz)                         # (I, 8H)
            Wb = bwd_slots(cb_ih, in_sz)                         # (I, 8H)
        else:
            # deeper layers: forward slab row t = [hf(t)|hb(T-1-t)],
            #                reversed slab row t = [hf(T-1-t)|hb(t)]
            def top(c): return {k: v[0:H] for k, v in c.items()}
            def bot(c): return {k: v[H:2 * H] for k, v in c.items()}
            Wa = jnp.concatenate([fwd_slots(top(cf_ih), H),      # hf(t)      -> fwd gates
                                  bwd_slots(bot(cb_ih), H)],     # hb(T-1-t)  -> bwd gates
                                 axis=0)                         # (2H, 8H)
            Wb = jnp.concatenate([bwd_slots(top(cb_ih), H),      # hf(T-1-t)  -> bwd gates
                                  fwd_slots(bot(cf_ih), H)],     # hb(t)      -> fwd gates
                                 axis=0)                         # (2H, 8H)

        cf_hh, cb_hh = gate_cols(pf["whh"]), gate_cols(pb["whh"])
        Whh = jnp.concatenate([fwd_slots(cf_hh, H),
                               bwd_slots(cb_hh, H)], axis=0)     # (2H, 8H) block-diag

        bf = (pf["bih"] + pf["bhh"]).astype(jnp.float32)
        bb = (pb["bih"] + pb["bhh"]).astype(jnp.float32)

        def bg(b): return dict(i=b[0:H], f=b[H:2 * H], g=b[2 * H:3 * H], o=b[3 * H:4 * H])
        gf, gb = bg(bf), bg(bb)
        b_pack = jnp.concatenate([gf['i'], gb['i'], gf['f'], gb['f'],
                                  gf['o'], gb['o'], gf['g'], gb['g']])[None, :]  # (1, 8H)

        packed.append((Wa, Wb, Whh, b_pack))

    lin_wt = jnp.transpose(lin_w).astype(jnp.float32)            # (H, O)
    lin_b2 = lin_b[None, :].astype(jnp.float32)                  # (1, O)
    return packed, lin_wt, lin_b2


# ----------------------------- wrapper -----------------------------------------

def bilstm_forward(x_bti, packed_layers, lin_wt, lin_b2, h0, c0):
    """Mirrors BiLSTM.forward (with deterministic initial states h0/c0)."""
    B, T, I = x_bti.shape
    num_layers = len(packed_layers)
    H, O = lin_wt.shape
    Bp = ((B + 7) // 8) * 8                       # pad batch to a full sublane group
    pad = Bp - B

    x = jnp.transpose(x_bti, (1, 0, 2)).astype(jnp.float32)      # (T, B, I)
    if pad:
        x = jnp.pad(x, ((0, 0), (0, pad), (0, 0)))
    x_f = x.reshape(T * Bp, I)                                   # forward-time slab
    x_r = x[::-1].reshape(T * Bp, I)                             # reverse-time slab

    def pack_state(s, l):                                        # (2L, B, H) -> (Bp, 2H)
        p = jnp.concatenate([s[2 * l], s[2 * l + 1]], axis=1).astype(jnp.float32)
        return jnp.pad(p, ((0, pad), (0, 0))) if pad else p

    args = [x_f, x_r]
    for l in range(num_layers):
        Wa, Wb, Whh, b_pack = packed_layers[l]
        args += [Wa, Wb, Whh, b_pack, pack_state(h0, l), pack_state(c0, l)]
    args += [lin_wt, lin_b2]

    kernel = _make_fused_bilstm_kernel(T, Bp, H, num_layers)
    vmem = pl.BlockSpec(memory_space=pltpu.MemorySpace.VMEM)
    pred = pl.pallas_call(
        kernel,
        out_shape=jax.ShapeDtypeStruct((Bp, O), jnp.float32),
        in_specs=[vmem] * len(args),
        out_specs=vmem,
        scratch_shapes=[pltpu.VMEM((T * Bp, 8 * H), jnp.float32)],
    )(*args)
    return pred[:B]


# ----------------------------- reference (pure JAX) ---------------------------

def _ref_cell(x_t, h, c, wih, whh, b, H):
    gates = x_t @ wih.T + h @ whh.T + b
    i = jax.nn.sigmoid(gates[:, 0 * H:1 * H])
    f = jax.nn.sigmoid(gates[:, 1 * H:2 * H])
    g = jnp.tanh(gates[:, 2 * H:3 * H])
    o = jax.nn.sigmoid(gates[:, 3 * H:4 * H])
    c_new = f * c + i * g
    h_new = o * jnp.tanh(c_new)
    return h_new, c_new


def ref_forward(x_bti, lstm_params, lin_w, lin_b, h0, c0, num_layers, hidden_size):
    B, T, _ = x_bti.shape
    H = hidden_size
    x = x_bti.astype(jnp.float32)
    for l in range(num_layers):
        dir_outs = []
        for d in range(2):
            p = lstm_params[l * 2 + d]
            b = p["bih"] + p["bhh"]
            h, c = h0[l * 2 + d], c0[l * 2 + d]
            ys = [None] * T
            trange = range(T) if d == 0 else range(T - 1, -1, -1)
            for t in trange:
                h, c = _ref_cell(x[:, t, :], h, c, p["wih"], p["whh"], b, H)
                ys[t] = h
            dir_outs.append(jnp.stack(ys, axis=1))               # (B, T, H)
        x = jnp.concatenate(dir_outs, axis=-1)                   # (B, T, 2H)
    out = x.reshape(B, T, 2, H).mean(axis=2)                     # (B, T, H)
    pred = out @ lin_w.T + lin_b
    return pred[:, -1, :]


# ----------------------------- main -------------------------------------------

if __name__ == "__main__":
    input_size, hidden_size, num_layers, output_size = 8, 32, 2, 4
    batch, seq_len = 2, 8

    key = jax.random.PRNGKey(0)
    bound = 1.0 / math.sqrt(hidden_size)

    lstm_params = []
    for l in range(num_layers):
        in_sz = input_size if l == 0 else 2 * hidden_size
        for d in range(2):
            key, k1, k2, k3, k4 = jax.random.split(key, 5)
            lstm_params.append(dict(
                wih=jax.random.uniform(k1, (4 * hidden_size, in_sz),
                                       jnp.float32, -bound, bound),
                whh=jax.random.uniform(k2, (4 * hidden_size, hidden_size),
                                       jnp.float32, -bound, bound),
                bih=jax.random.uniform(k3, (4 * hidden_size,),
                                       jnp.float32, -bound, bound),
                bhh=jax.random.uniform(k4, (4 * hidden_size,),
                                       jnp.float32, -bound, bound),
            ))

    key, kw, kb, kx, kh, kc = jax.random.split(key, 6)
    lin_w = jax.random.uniform(kw, (output_size, hidden_size),
                               jnp.float32, -bound, bound)
    lin_b = jax.random.uniform(kb, (output_size,), jnp.float32, -bound, bound)

    x = jax.random.normal(kx, (batch, seq_len, input_size), jnp.float32)

    # TODO(synk): PyTorch's forward draws fresh torch.randn h_0/c_0 on every call
    # (nondeterministic); here they are drawn deterministically from the PRNG key instead.
    h0 = jax.random.normal(kh, (2 * num_layers, batch, hidden_size), jnp.float32)
    c0 = jax.random.normal(kc, (2 * num_layers, batch, hidden_size), jnp.float32)

    # Pack / transpose all weights once at setup time (not per forward call).
    packed_layers, lin_wt, lin_b2 = pack_bilstm_params(
        lstm_params, lin_w, lin_b, hidden_size, num_layers)

    fwd = jax.jit(bilstm_forward)
    pred = jax.block_until_ready(fwd(x, packed_layers, lin_wt, lin_b2, h0, c0))

    ref = ref_forward(x, lstm_params, lin_w, lin_b, h0, c0, num_layers, hidden_size)
    assert pred.shape == (batch, output_size)
    assert jnp.allclose(pred, ref, atol=5e-3, rtol=5e-3), (pred, ref)

    print("KERNEL_OK")
</pallas_src>

<mosaic_0001>
module attributes {stable_mosaic.version = 11 : i64} {
  func.func @kernel(%arg0: memref<64x8xf32, #tpu.memory_space<vmem>>, %arg1: memref<64x8xf32, #tpu.memory_space<vmem>>, %arg2: memref<8x256xf32, #tpu.memory_space<vmem>>, %arg3: memref<8x256xf32, #tpu.memory_space<vmem>>, %arg4: memref<64x256xf32, #tpu.memory_space<vmem>>, %arg5: memref<1x256xf32, #tpu.memory_space<vmem>>, %arg6: memref<8x64xf32, #tpu.memory_space<vmem>>, %arg7: memref<8x64xf32, #tpu.memory_space<vmem>>, %arg8: memref<64x256xf32, #tpu.memory_space<vmem>>, %arg9: memref<64x256xf32, #tpu.memory_space<vmem>>, %arg10: memref<64x256xf32, #tpu.memory_space<vmem>>, %arg11: memref<1x256xf32, #tpu.memory_space<vmem>>, %arg12: memref<8x64xf32, #tpu.memory_space<vmem>>, %arg13: memref<8x64xf32, #tpu.memory_space<vmem>>, %arg14: memref<32x4xf32, #tpu.memory_space<vmem>>, %arg15: memref<1x4xf32, #tpu.memory_space<vmem>>, %arg16: memref<8x4xf32, #tpu.memory_space<vmem>>, %arg17: memref<64x256xf32, #tpu.memory_space<vmem>>) attributes {dimension_semantics = [], scalar_prefetch = 0 : i64, scratch_operands = 1 : i64, tpu.core_type = #tpu.core_type<tc>} {
    %c0 = arith.constant 0 : index
    %c0_0 = arith.constant 0 : index
    %0 = vector.load %arg0[%c0, %c0_0] : memref<64x8xf32, #tpu.memory_space<vmem>>, vector<64x8xf32>
    %c0_1 = arith.constant 0 : index
    %c0_2 = arith.constant 0 : index
    %1 = vector.load %arg1[%c0_1, %c0_2] : memref<64x8xf32, #tpu.memory_space<vmem>>, vector<64x8xf32>
    %c0_3 = arith.constant 0 : index
    %c0_4 = arith.constant 0 : index
    %2 = vector.load %arg2[%c0_3, %c0_4] : memref<8x256xf32, #tpu.memory_space<vmem>>, vector<8x256xf32>
    %cst = arith.constant dense<0.000000e+00> : vector<64x256xf32>
    %3 = tpu.matmul %0, %2, %cst {dimension_numbers = #tpu.dot_dimension_numbers<[1], [0], [0], [1], [0, 0, 1, 1], [], []>} : vector<64x8xf32>, vector<8x256xf32>, vector<64x256xf32> -> vector<64x256xf32>
    %c0_5 = arith.constant 0 : index
    %c0_6 = arith.constant 0 : index
    %4 = vector.load %arg3[%c0_5, %c0_6] : memref<8x256xf32, #tpu.memory_space<vmem>>, vector<8x256xf32>
    %cst_7 = arith.constant dense<0.000000e+00> : vector<64x256xf32>
    %5 = tpu.matmul %1, %4, %cst_7 {dimension_numbers = #tpu.dot_dimension_numbers<[1], [0], [0], [1], [0, 0, 1, 1], [], []>} : vector<64x8xf32>, vector<8x256xf32>, vector<64x256xf32> -> vector<64x256xf32>
    %6 = arith.addf %3, %5 : vector<64x256xf32>
    %c0_8 = arith.constant 0 : index
    %c0_9 = arith.constant 0 : index
    %7 = vector.load %arg5[%c0_8, %c0_9] : memref<1x256xf32, #tpu.memory_space<vmem>>, vector<1x256xf32>
    %8 = vector.broadcast %7 : vector<1x256xf32> to vector<64x256xf32>
    %9 = arith.addf %6, %8 : vector<64x256xf32>
    %c0_10 = arith.constant 0 : index
    %c0_11 = arith.constant 0 : index
    %10 = vector.load %arg17[%c0_10, %c0_11] : memref<64x256xf32, #tpu.memory_space<vmem>>, vector<64x256xf32>
    tpu.vector_store %arg17[%c0_10, %c0_11], %9 {strides = array<i32>} : memref<64x256xf32, #tpu.memory_space<vmem>>, vector<64x256xf32>,
    %c0_12 = arith.constant 0 : index
    %c0_13 = arith.constant 0 : index
    %11 = vector.load %arg4[%c0_12, %c0_13] : memref<64x256xf32, #tpu.memory_space<vmem>>, vector<64x256xf32>
    %c0_14 = arith.constant 0 : index
    %c0_15 = arith.constant 0 : index
    %12 = vector.load %arg6[%c0_14, %c0_15] : memref<8x64xf32, #tpu.memory_space<vmem>>, vector<8x64xf32>
    %c0_16 = arith.constant 0 : index
    %c0_17 = arith.constant 0 : index
    %13 = vector.load %arg7[%c0_16, %c0_17] : memref<8x64xf32, #tpu.memory_space<vmem>>, vector<8x64xf32>
    %c0_18 = arith.constant 0 : index
    %c0_19 = arith.constant 0 : index
    %14 = vector.load %arg17[%c0_18, %c0_19] : memref<64x256xf32, #tpu.memory_space<vmem>>, vector<8x256xf32>
    %cst_20 = arith.constant dense<0.000000e+00> : vector<8x256xf32>
    %15 = tpu.matmul %12, %11, %cst_20 {dimension_numbers = #tpu.dot_dimension_numbers<[1], [0], [0], [1], [0, 0, 1, 1], [], []>} : vector<8x64xf32>, vector<64x256xf32>, vector<8x256xf32> -> vector<8x256xf32>
    %16 = arith.addf %14, %15 : vector<8x256xf32>
    %17 = vector.extract_strided_slice %16 {offsets = [0, 0], sizes = [8, 192], strides = [1, 1]} : vector<8x256xf32> to vector<8x192xf32>
    %18 = arith.negf %17 : vector<8x192xf32>
    %19 = math.exp %18 : vector<8x192xf32>
    %cst_21 = arith.constant 1.000000e+00 : f32
    %20 = vector.broadcast %cst_21 : f32 to vector<8x192xf32>
    %21 = arith.addf %20, %19 : vector<8x192xf32>
    %22 = arith.divf %20, %21 : vector<8x192xf32>
    %23 = vector.extract_strided_slice %16 {offsets = [0, 192], sizes = [8, 64], strides = [1, 1]} : vector<8x256xf32> to vector<8x64xf32>
    %24 = math.tanh %23 : vector<8x64xf32>
    %25 = vector.extract_strided_slice %22 {offsets = [0, 64], sizes = [8, 64], strides = [1, 1]} : vector<8x192xf32> to vector<8x64xf32>
    %26 = arith.mulf %25, %13 : vector<8x64xf32>
    %27 = vector.extract_strided_slice %22 {offsets = [0, 0], sizes = [8, 64], strides = [1, 1]} : vector<8x192xf32> to vector<8x64xf32>
    %28 = arith.mulf %27, %24 : vector<8x64xf32>
    %29 = arith.addf %26, %28 : vector<8x64xf32>
    %30 = vector.extract_strided_slice %22 {offsets = [0, 128], sizes = [8, 64], strides = [1, 1]} : vector<8x192xf32> to vector<8x64xf32>
    %31 = math.tanh %29 : vector<8x64xf32>
    %32 = arith.mulf %30, %31 : vector<8x64xf32>
    %c8 = arith.constant 8 : index
    %c0_22 = arith.constant 0 : index
    %33 = vector.load %arg17[%c8, %c0_22] : memref<64x256xf32, #tpu.memory_space<vmem>>, vector<8x256xf32>
    %cst_23 = arith.constant dense<0.000000e+00> : vector<8x256xf32>
    %34 = tpu.matmul %32, %11, %cst_23 {dimension_numbers = #tpu.dot_dimension_numbers<[1], [0], [0], [1], [0, 0, 1, 1], [], []>} : vector<8x64xf32>, vector<64x256xf32>, vector<8x256xf32> -> vector<8x256xf32>
    %35 = arith.addf %33, %34 : vector<8x256xf32>
    %36 = vector.extract_strided_slice %35 {offsets = [0, 0], sizes = [8, 192], strides = [1, 1]} : vector<8x256xf32> to vector<8x192xf32>
    %37 = arith.negf %36 : vector<8x192xf32>
    %38 = math.exp %37 : vector<8x192xf32>
    %cst_24 = arith.constant 1.000000e+00 : f32
    %39 = vector.broadcast %cst_24 : f32 to vector<8x192xf32>
    %40 = arith.addf %39, %38 : vector<8x192xf32>
    %41 = arith.divf %39, %40 : vector<8x192xf32>
    %42 = vector.extract_strided_slice %35 {offsets = [0, 192], sizes = [8, 64], strides = [1, 1]} : vector<8x256xf32> to vector<8x64xf32>
    %43 = math.tanh %42 : vector<8x64xf32>
    %44 = vector.extract_strided_slice %41 {offsets = [0, 64], sizes = [8, 64], strides = [1, 1]} : vector<8x192xf32> to vector<8x64xf32>
    %45 = arith.mulf %44, %29 : vector<8x64xf32>
    %46 = vector.extract_strided_slice %41 {offsets = [0, 0], sizes = [8, 64], strides = [1, 1]} : vector<8x192xf32> to vector<8x64xf32>
    %47 = arith.mulf %46, %43 : vector<8x64xf32>
    %48 = arith.addf %45, %47 : vector<8x64xf32>
    %49 = vector.extract_strided_slice %41 {offsets = [0, 128], sizes = [8, 64], strides = [1, 1]} : vector<8x192xf32> to vector<8x64xf32>
    %50 = math.tanh %48 : vector<8x64xf32>
    %51 = arith.mulf %49, %50 : vector<8x64xf32>
    %c16 = arith.constant 16 : index
    %c0_25 = arith.constant 0 : index
    %52 = vector.load %arg17[%c16, %c0_25] : memref<64x256xf32, #tpu.memory_space<vmem>>, vector<8x256xf32>
    %cst_26 = arith.constant dense<0.000000e+00> : vector<8x256xf32>
    %53 = tpu.matmul %51, %11, %cst_26 {dimension_numbers = #tpu.dot_dimension_numbers<[1], [0], [0], [1], [0, 0, 1, 1], [], []>} : vector<8x64xf32>, vector<64x256xf32>, vector<8x256xf32> -> vector<8x256xf32>
    %54 = arith.addf %52, %53 : vector<8x256xf32>
    %55 = vector.extract_strided_slice %54 {offsets = [0, 0], sizes = [8, 192], strides = [1, 1]} : vector<8x256xf32> to vector<8x192xf32>
    %56 = arith.negf %55 : vector<8x192xf32>
    %57 = math.exp %56 : vector<8x192xf32>
    %cst_27 = arith.constant 1.000000e+00 : f32
    %58 = vector.broadcast %cst_27 : f32 to vector<8x192xf32>
    %59 = arith.addf %58, %57 : vector<8x192xf32>
    %60 = arith.divf %58, %59 : vector<8x192xf32>
    %61 = vector.extract_strided_slice %54 {offsets = [0, 192], sizes = [8, 64], strides = [1, 1]} : vector<8x256xf32> to vector<8x64xf32>
    %62 = math.tanh %61 : vector<8x64xf32>
    %63 = vector.extract_strided_slice %60 {offsets = [0, 64], sizes = [8, 64], strides = [1, 1]} : vector<8x192xf32> to vector<8x64xf32>
    %64 = arith.mulf %63, %48 : vector<8x64xf32>
    %65 = vector.extract_strided_slice %60 {offsets = [0, 0], sizes = [8, 64], strides = [1, 1]} : vector<8x192xf32> to vector<8x64xf32>
    %66 = arith.mulf %65, %62 : vector<8x64xf32>
    %67 = arith.addf %64, %66 : vector<8x64xf32>
    %68 = vector.extract_strided_slice %60 {offsets = [0, 128], sizes = [8, 64], strides = [1, 1]} : vector<8x192xf32> to vector<8x64xf32>
    %69 = math.tanh %67 : vector<8x64xf32>
    %70 = arith.mulf %68, %69 : vector<8x64xf32>
    %c24 = arith.constant 24 : index
    %c0_28 = arith.constant 0 : index
    %71 = vector.load %arg17[%c24, %c0_28] : memref<64x256xf32, #tpu.memory_space<vmem>>, vector<8x256xf32>
    %cst_29 = arith.constant dense<0.000000e+00> : vector<8x256xf32>
    %72 = tpu.matmul %70, %11, %cst_29 {dimension_numbers = #tpu.dot_dimension_numbers<[1], [0], [0], [1], [0, 0, 1, 1], [], []>} : vector<8x64xf32>, vector<64x256xf32>, vector<8x256xf32> -> vector<8x256xf32>
    %73 = arith.addf %71, %72 : vector<8x256xf32>
    %74 = vector.extract_strided_slice %73 {offsets = [0, 0], sizes = [8, 192], strides = [1, 1]} : vector<8x256xf32> to vector<8x192xf32>
    %75 = arith.negf %74 : vector<8x192xf32>
    %76 = math.exp %75 : vector<8x192xf32>
    %cst_30 = arith.constant 1.000000e+00 : f32
    %77 = vector.broadcast %cst_30 : f32 to vector<8x192xf32>
    %78 = arith.addf %77, %76 : vector<8x192xf32>
    %79 = arith.divf %77, %78 : vector<8x192xf32>
    %80 = vector.extract_strided_slice %73 {offsets = [0, 192], sizes = [8, 64], strides = [1, 1]} : vector<8x256xf32> to vector<8x64xf32>
    %81 = math.tanh %80 : vector<8x64xf32>
    %82 = vector.extract_strided_slice %79 {offsets = [0, 64], sizes = [8, 64], strides = [1, 1]} : vector<8x192xf32> to vector<8x64xf32>
    %83 = arith.mulf %82, %67 : vector<8x64xf32>
    %84 = vector.extract_strided_slice %79 {offsets = [0, 0], sizes = [8, 64], strides = [1, 1]} : vector<8x192xf32> to vector<8x64xf32>
    %85 = arith.mulf %84, %81 : vector<8x64xf32>
    %86 = arith.addf %83, %85 : vector<8x64xf32>
    %87 = vector.extract_strided_slice %79 {offsets = [0, 128], sizes = [8, 64], strides = [1, 1]} : vector<8x192xf32> to vector<8x64xf32>
    %88 = math.tanh %86 : vector<8x64xf32>
    %89 = arith.mulf %87, %88 : vector<8x64xf32>
    %c32 = arith.constant 32 : index
    %c0_31 = arith.constant 0 : index
    %90 = vector.load %arg17[%c32, %c0_31] : memref<64x256xf32, #tpu.memory_space<vmem>>, vector<8x256xf32>
    %cst_32 = arith.constant dense<0.000000e+00> : vector<8x256xf32>
    %91 = tpu.matmul %89, %11, %cst_32 {dimension_numbers = #tpu.dot_dimension_numbers<[1], [0], [0], [1], [0, 0, 1, 1], [], []>} : vector<8x64xf32>, vector<64x256xf32>, vector<8x256xf32> -> vector<8x256xf32>
    %92 = arith.addf %90, %91 : vector<8x256xf32>
    %93 = vector.extract_strided_slice %92 {offsets = [0, 0], sizes = [8, 192], strides = [1, 1]} : vector<8x256xf32> to vector<8x192xf32>
    %94 = arith.negf %93 : vector<8x192xf32>
    %95 = math.exp %94 : vector<8x192xf32>
    %cst_33 = arith.constant 1.000000e+00 : f32
    %96 = vector.broadcast %cst_33 : f32 to vector<8x192xf32>
    %97 = arith.addf %96, %95 : vector<8x192xf32>
    %98 = arith.divf %96, %97 : vector<8x192xf32>
    %99 = vector.extract_strided_slice %92 {offsets = [0, 192], sizes = [8, 64], strides = [1, 1]} : vector<8x256xf32> to vector<8x64xf32>
    %100 = math.tanh %99 : vector<8x64xf32>
    %101 = vector.extract_strided_slice %98 {offsets = [0, 64], sizes = [8, 64], strides = [1, 1]} : vector<8x192xf32> to vector<8x64xf32>
    %102 = arith.mulf %101, %86 : vector<8x64xf32>
    %103 = vector.extract_strided_slice %98 {offsets = [0, 0], sizes = [8, 64], strides = [1, 1]} : vector<8x192xf32> to vector<8x64xf32>
    %104 = arith.mulf %103, %100 : vector<8x64xf32>
    %105 = arith.addf %102, %104 : vector<8x64xf32>
    %106 = vector.extract_strided_slice %98 {offsets = [0, 128], sizes = [8, 64], strides = [1, 1]} : vector<8x192xf32> to vector<8x64xf32>
    %107 = math.tanh %105 : vector<8x64xf32>
    %108 = arith.mulf %106, %107 : vector<8x64xf32>
    %c40 = arith.constant 40 : index
    %c0_34 = arith.constant 0 : index
    %109 = vector.load %arg17[%c40, %c0_34] : memref<64x256xf32, #tpu.memory_space<vmem>>, vector<8x256xf32>
    %cst_35 = arith.constant dense<0.000000e+00> : vector<8x256xf32>
    %110 = tpu.matmul %108, %11, %cst_35 {dimension_numbers = #tpu.dot_dimension_numbers<[1], [0], [0], [1], [0, 0, 1, 1], [], []>} : vector<8x64xf32>, vector<64x256xf32>, vector<8x256xf32> -> vector<8x256xf32>
    %111 = arith.addf %109, %110 : vector<8x256xf32>
    %112 = vector.extract_strided_slice %111 {offsets = [0, 0], sizes = [8, 192], strides = [1, 1]} : vector<8x256xf32> to vector<8x192xf32>
    %113 = arith.negf %112 : vector<8x192xf32>
    %114 = math.exp %113 : vector<8x192xf32>
    %cst_36 = arith.constant 1.000000e+00 : f32
    %115 = vector.broadcast %cst_36 : f32 to vector<8x192xf32>
    %116 = arith.addf %115, %114 : vector<8x192xf32>
    %117 = arith.divf %115, %116 : vector<8x192xf32>
    %118 = vector.extract_strided_slice %111 {offsets = [0, 192], sizes = [8, 64], strides = [1, 1]} : vector<8x256xf32> to vector<8x64xf32>
    %119 = math.tanh %118 : vector<8x64xf32>
    %120 = vector.extract_strided_slice %117 {offsets = [0, 64], sizes = [8, 64], strides = [1, 1]} : vector<8x192xf32> to vector<8x64xf32>
    %121 = arith.mulf %120, %105 : vector<8x64xf32>
    %122 = vector.extract_strided_slice %117 {offsets = [0, 0], sizes = [8, 64], strides = [1, 1]} : vector<8x192xf32> to vector<8x64xf32>
    %123 = arith.mulf %122, %119 : vector<8x64xf32>
    %124 = arith.addf %121, %123 : vector<8x64xf32>
    %125 = vector.extract_strided_slice %117 {offsets = [0, 128], sizes = [8, 64], strides = [1, 1]} : vector<8x192xf32> to vector<8x64xf32>
    %126 = math.tanh %124 : vector<8x64xf32>
    %127 = arith.mulf %125, %126 : vector<8x64xf32>
    %c48 = arith.constant 48 : index
    %c0_37 = arith.constant 0 : index
    %128 = vector.load %arg17[%c48, %c0_37] : memref<64x256xf32, #tpu.memory_space<vmem>>, vector<8x256xf32>
    %cst_38 = arith.constant dense<0.000000e+00> : vector<8x256xf32>
    %129 = tpu.matmul %127, %11, %cst_38 {dimension_numbers = #tpu.dot_dimension_numbers<[1], [0], [0], [1], [0, 0, 1, 1], [], []>} : vector<8x64xf32>, vector<64x256xf32>, vector<8x256xf32> -> vector<8x256xf32>
    %130 = arith.addf %128, %129 : vector<8x256xf32>
    %131 = vector.extract_strided_slice %130 {offsets = [0, 0], sizes = [8, 192], strides = [1, 1]} : vector<8x256xf32> to vector<8x192xf32>
    %132 = arith.negf %131 : vector<8x192xf32>
    %133 = math.exp %132 : vector<8x192xf32>
    %cst_39 = arith.constant 1.000000e+00 : f32
    %134 = vector.broadcast %cst_39 : f32 to vector<8x192xf32>
    %135 = arith.addf %134, %133 : vector<8x192xf32>
    %136 = arith.divf %134, %135 : vector<8x192xf32>
    %137 = vector.extract_strided_slice %130 {offsets = [0, 192], sizes = [8, 64], strides = [1, 1]} : vector<8x256xf32> to vector<8x64xf32>
    %138 = math.tanh %137 : vector<8x64xf32>
    %139 = vector.extract_strided_slice %136 {offsets = [0, 64], sizes = [8, 64], strides = [1, 1]} : vector<8x192xf32> to vector<8x64xf32>
    %140 = arith.mulf %139, %124 : vector<8x64xf32>
    %141 = vector.extract_strided_slice %136 {offsets = [0, 0], sizes = [8, 64], strides = [1, 1]} : vector<8x192xf32> to vector<8x64xf32>
    %142 = arith.mulf %141, %138 : vector<8x64xf32>
    %143 = arith.addf %140, %142 : vector<8x64xf32>
    %144 = vector.extract_strided_slice %136 {offsets = [0, 128], sizes = [8, 64], strides = [1, 1]} : vector<8x192xf32> to vector<8x64xf32>
    %145 = math.tanh %143 : vector<8x64xf32>
    %146 = arith.mulf %144, %145 : vector<8x64xf32>
    %c56 = arith.constant 56 : index
    %c0_40 = arith.constant 0 : index
    %147 = vector.load %arg17[%c56, %c0_40] : memref<64x256xf32, #tpu.memory_space<vmem>>, vector<8x256xf32>
    %cst_41 = arith.constant dense<0.000000e+00> : vector<8x256xf32>
    %148 = tpu.matmul %146, %11, %cst_41 {dimension_numbers = #tpu.dot_dimension_numbers<[1], [0], [0], [1], [0, 0, 1, 1], [], []>} : vector<8x64xf32>, vector<64x256xf32>, vector<8x256xf32> -> vector<8x256xf32>
    %149 = arith.addf %147, %148 : vector<8x256xf32>
    %150 = vector.extract_strided_slice %149 {offsets = [0, 0], sizes = [8, 192], strides = [1, 1]} : vector<8x256xf32> to vector<8x192xf32>
    %151 = arith.negf %150 : vector<8x192xf32>
    %152 = math.exp %151 : vector<8x192xf32>
    %cst_42 = arith.constant 1.000000e+00 : f32
    %153 = vector.broadcast %cst_42 : f32 to vector<8x192xf32>
    %154 = arith.addf %153, %152 : vector<8x192xf32>
    %155 = arith.divf %153, %154 : vector<8x192xf32>
    %156 = vector.extract_strided_slice %149 {offsets = [0, 192], sizes = [8, 64], strides = [1, 1]} : vector<8x256xf32> to vector<8x64xf32>
    %157 = math.tanh %156 : vector<8x64xf32>
    %158 = vector.extract_strided_slice %155 {offsets = [0, 64], sizes = [8, 64], strides = [1, 1]} : vector<8x192xf32> to vector<8x64xf32>
    %159 = arith.mulf %158, %143 : vector<8x64xf32>
    %160 = vector.extract_strided_slice %155 {offsets = [0, 0], sizes = [8, 64], strides = [1, 1]} : vector<8x192xf32> to vector<8x64xf32>
    %161 = arith.mulf %160, %157 : vector<8x64xf32>
    %162 = arith.addf %159, %161 : vector<8x64xf32>
    %163 = vector.extract_strided_slice %155 {offsets = [0, 128], sizes = [8, 64], strides = [1, 1]} : vector<8x192xf32> to vector<8x64xf32>
    %164 = math.tanh %162 : vector<8x64xf32>
    %165 = arith.mulf %163, %164 : vector<8x64xf32>
    %166 = tpu.concatenate %32, %51, %70, %89, %108, %127, %146, %165 in 0 : vector<8x64xf32>, vector<8x64xf32>, vector<8x64xf32>, vector<8x64xf32>, vector<8x64xf32>, vector<8x64xf32>, vector<8x64xf32>, vector<8x64xf32> -> vector<64x64xf32>
    %167 = tpu.concatenate %165, %146, %127, %108, %89, %70, %51, %32 in 0 : vector<8x64xf32>, vector<8x64xf32>, vector<8x64xf32>, vector<8x64xf32>, vector<8x64xf32>, vector<8x64xf32>, vector<8x64xf32>, vector<8x64xf32> -> vector<64x64xf32>
    %c0_43 = arith.constant 0 : index
    %c0_44 = arith.constant 0 : index
    %168 = vector.load %arg8[%c0_43, %c0_44] : memref<64x256xf32, #tpu.memory_space<vmem>>, vector<64x256xf32>
    %cst_45 = arith.constant dense<0.000000e+00> : vector<64x256xf32>
    %169 = tpu.matmul %166, %168, %cst_45 {dimension_numbers = #tpu.dot_dimension_numbers<[1], [0], [0], [1], [0, 0, 1, 1], [], []>} : vector<64x64xf32>, vector<64x256xf32>, vector<64x256xf32> -> vector<64x256xf32>
    %c0_46 = arith.constant 0 : index
    %c0_47 = arith.constant 0 : index
    %170 = vector.load %arg9[%c0_46, %c0_47] : memref<64x256xf32, #tpu.memory_space<vmem>>, vector<64x256xf32>
    %cst_48 = arith.constant dense<0.000000e+00> : vector<64x256xf32>
    %171 = tpu.matmul %167, %170, %cst_48 {dimension_numbers = #tpu.dot_dimension_numbers<[1], [0], [0], [1], [0, 0, 1, 1], [], []>} : vector<64x64xf32>, vector<64x256xf32>, vector<64x256xf32> -> vector<64x256xf32>
    %172 = arith.addf %169, %171 : vector<64x256xf32>
    %c0_49 = arith.constant 0 : index
    %c0_50 = arith.constant 0 : index
    %173 = vector.load %arg11[%c0_49, %c0_50] : memref<1x256xf32, #tpu.memory_space<vmem>>, vector<1x256xf32>
    %174 = vector.broadcast %173 : vector<1x256xf32> to vector<64x256xf32>
    %175 = arith.addf %172, %174 : vector<64x256xf32>
    %c0_51 = arith.constant 0 : index
    %c0_52 = arith.constant 0 : index
    %176 = vector.load %arg17[%c0_51, %c0_52] : memref<64x256xf32, #tpu.memory_space<vmem>>, vector<64x256xf32>
    tpu.vector_store %arg17[%c0_51, %c0_52], %175 {strides = array<i32>} : memref<64x256xf32, #tpu.memory_space<vmem>>, vector<64x256xf32>,
    %c0_53 = arith.constant 0 : index
    %c0_54 = arith.constant 0 : index
    %177 = vector.load %arg10[%c0_53, %c0_54] : memref<64x256xf32, #tpu.memory_space<vmem>>, vector<64x256xf32>
    %c0_55 = arith.constant 0 : index
    %c0_56 = arith.constant 0 : index
    %178 = vector.load %arg12[%c0_55, %c0_56] : memref<8x64xf32, #tpu.memory_space<vmem>>, vector<8x64xf32>
    %c0_57 = arith.constant 0 : index
    %c0_58 = arith.constant 0 : index
    %179 = vector.load %arg13[%c0_57, %c0_58] : memref<8x64xf32, #tpu.memory_space<vmem>>, vector<8x64xf32>
    %c0_59 = arith.constant 0 : index
    %c0_60 = arith.constant 0 : index
    %180 = vector.load %arg17[%c0_59, %c0_60] : memref<64x256xf32, #tpu.memory_space<vmem>>, vector<8x256xf32>
    %cst_61 = arith.constant dense<0.000000e+00> : vector<8x256xf32>
    %181 = tpu.matmul %178, %177, %cst_61 {dimension_numbers = #tpu.dot_dimension_numbers<[1], [0], [0], [1], [0, 0, 1, 1], [], []>} : vector<8x64xf32>, vector<64x256xf32>, vector<8x256xf32> -> vector<8x256xf32>
    %182 = arith.addf %180, %181 : vector<8x256xf32>
    %183 = vector.extract_strided_slice %182 {offsets = [0, 0], sizes = [8, 192], strides = [1, 1]} : vector<8x256xf32> to vector<8x192xf32>
    %184 = arith.negf %183 : vector<8x192xf32>
    %185 = math.exp %184 : vector<8x192xf32>
    %cst_62 = arith.constant 1.000000e+00 : f32
    %186 = vector.broadcast %cst_62 : f32 to vector<8x192xf32>
    %187 = arith.addf %186, %185 : vector<8x192xf32>
    %188 = arith.divf %186, %187 : vector<8x192xf32>
    %189 = vector.extract_strided_slice %182 {offsets = [0, 192], sizes = [8, 64], strides = [1, 1]} : vector<8x256xf32> to vector<8x64xf32>
    %190 = math.tanh %189 : vector<8x64xf32>
    %191 = vector.extract_strided_slice %188 {offsets = [0, 64], sizes = [8, 64], strides = [1, 1]} : vector<8x192xf32> to vector<8x64xf32>
    %192 = arith.mulf %191, %179 : vector<8x64xf32>
    %193 = vector.extract_strided_slice %188 {offsets = [0, 0], sizes = [8, 64], strides = [1, 1]} : vector<8x192xf32> to vector<8x64xf32>
    %194 = arith.mulf %193, %190 : vector<8x64xf32>
    %195 = arith.addf %192, %194 : vector<8x64xf32>
    %196 = vector.extract_strided_slice %188 {offsets = [0, 128], sizes = [8, 64], strides = [1, 1]} : vector<8x192xf32> to vector<8x64xf32>
    %197 = math.tanh %195 : vector<8x64xf32>
    %198 = arith.mulf %196, %197 : vector<8x64xf32>
    %c8_63 = arith.constant 8 : index
    %c0_64 = arith.constant 0 : index
    %199 = vector.load %arg17[%c8_63, %c0_64] : memref<64x256xf32, #tpu.memory_space<vmem>>, vector<8x256xf32>
    %cst_65 = arith.constant dense<0.000000e+00> : vector<8x256xf32>
    %200 = tpu.matmul %198, %177, %cst_65 {dimension_numbers = #tpu.dot_dimension_numbers<[1], [0], [0], [1], [0, 0, 1, 1], [], []>} : vector<8x64xf32>, vector<64x256xf32>, vector<8x256xf32> -> vector<8x256xf32>
    %201 = arith.addf %199, %200 : vector<8x256xf32>
    %202 = vector.extract_strided_slice %201 {offsets = [0, 0], sizes = [8, 192], strides = [1, 1]} : vector<8x256xf32> to vector<8x192xf32>
    %203 = arith.negf %202 : vector<8x192xf32>
    %204 = math.exp %203 : vector<8x192xf32>
    %cst_66 = arith.constant 1.000000e+00 : f32
    %205 = vector.broadcast %cst_66 : f32 to vector<8x192xf32>
    %206 = arith.addf %205, %204 : vector<8x192xf32>
    %207 = arith.divf %205, %206 : vector<8x192xf32>
    %208 = vector.extract_strided_slice %201 {offsets = [0, 192], sizes = [8, 64], strides = [1, 1]} : vector<8x256xf32> to vector<8x64xf32>
    %209 = math.tanh %208 : vector<8x64xf32>
    %210 = vector.extract_strided_slice %207 {offsets = [0, 64], sizes = [8, 64], strides = [1, 1]} : vector<8x192xf32> to vector<8x64xf32>
    %211 = arith.mulf %210, %195 : vector<8x64xf32>
    %212 = vector.extract_strided_slice %207 {offsets = [0, 0], sizes = [8, 64], strides = [1, 1]} : vector<8x192xf32> to vector<8x64xf32>
    %213 = arith.mulf %212, %209 : vector<8x64xf32>
    %214 = arith.addf %211, %213 : vector<8x64xf32>
    %215 = vector.extract_strided_slice %207 {offsets = [0, 128], sizes = [8, 64], strides = [1, 1]} : vector<8x192xf32> to vector<8x64xf32>
    %216 = math.tanh %214 : vector<8x64xf32>
    %217 = arith.mulf %215, %216 : vector<8x64xf32>
    %c16_67 = arith.constant 16 : index
    %c0_68 = arith.constant 0 : index
    %218 = vector.load %arg17[%c16_67, %c0_68] : memref<64x256xf32, #tpu.memory_space<vmem>>, vector<8x256xf32>
    %cst_69 = arith.constant dense<0.000000e+00> : vector<8x256xf32>
    %219 = tpu.matmul %217, %177, %cst_69 {dimension_numbers = #tpu.dot_dimension_numbers<[1], [0], [0], [1], [0, 0, 1, 1], [], []>} : vector<8x64xf32>, vector<64x256xf32>, vector<8x256xf32> -> vector<8x256xf32>
    %220 = arith.addf %218, %219 : vector<8x256xf32>
    %221 = vector.extract_strided_slice %220 {offsets = [0, 0], sizes = [8, 192], strides = [1, 1]} : vector<8x256xf32> to vector<8x192xf32>
    %222 = arith.negf %221 : vector<8x192xf32>
    %223 = math.exp %222 : vector<8x192xf32>
    %cst_70 = arith.constant 1.000000e+00 : f32
    %224 = vector.broadcast %cst_70 : f32 to vector<8x192xf32>
    %225 = arith.addf %224, %223 : vector<8x192xf32>
    %226 = arith.divf %224, %225 : vector<8x192xf32>
    %227 = vector.extract_strided_slice %220 {offsets = [0, 192], sizes = [8, 64], strides = [1, 1]} : vector<8x256xf32> to vector<8x64xf32>
    %228 = math.tanh %227 : vector<8x64xf32>
    %229 = vector.extract_strided_slice %226 {offsets = [0, 64], sizes = [8, 64], strides = [1, 1]} : vector<8x192xf32> to vector<8x64xf32>
    %230 = arith.mulf %229, %214 : vector<8x64xf32>
    %231 = vector.extract_strided_slice %226 {offsets = [0, 0], sizes = [8, 64], strides = [1, 1]} : vector<8x192xf32> to vector<8x64xf32>
    %232 = arith.mulf %231, %228 : vector<8x64xf32>
    %233 = arith.addf %230, %232 : vector<8x64xf32>
    %234 = vector.extract_strided_slice %226 {offsets = [0, 128], sizes = [8, 64], strides = [1, 1]} : vector<8x192xf32> to vector<8x64xf32>
    %235 = math.tanh %233 : vector<8x64xf32>
    %236 = arith.mulf %234, %235 : vector<8x64xf32>
    %c24_71 = arith.constant 24 : index
    %c0_72 = arith.constant 0 : index
    %237 = vector.load %arg17[%c24_71, %c0_72] : memref<64x256xf32, #tpu.memory_space<vmem>>, vector<8x256xf32>
    %cst_73 = arith.constant dense<0.000000e+00> : vector<8x256xf32>
    %238 = tpu.matmul %236, %177, %cst_73 {dimension_numbers = #tpu.dot_dimension_numbers<[1], [0], [0], [1], [0, 0, 1, 1], [], []>} : vector<8x64xf32>, vector<64x256xf32>, vector<8x256xf32> -> vector<8x256xf32>
    %239 = arith.addf %237, %238 : vector<8x256xf32>
    %240 = vector.extract_strided_slice %239 {offsets = [0, 0], sizes = [8, 192], strides = [1, 1]} : vector<8x256xf32> to vector<8x192xf32>
    %241 = arith.negf %240 : vector<8x192xf32>
    %242 = math.exp %241 : vector<8x192xf32>
    %cst_74 = arith.constant 1.000000e+00 : f32
    %243 = vector.broadcast %cst_74 : f32 to vector<8x192xf32>
    %244 = arith.addf %243, %242 : vector<8x192xf32>
    %245 = arith.divf %243, %244 : vector<8x192xf32>
    %246 = vector.extract_strided_slice %239 {offsets = [0, 192], sizes = [8, 64], strides = [1, 1]} : vector<8x256xf32> to vector<8x64xf32>
    %247 = math.tanh %246 : vector<8x64xf32>
    %248 = vector.extract_strided_slice %245 {offsets = [0, 64], sizes = [8, 64], strides = [1, 1]} : vector<8x192xf32> to vector<8x64xf32>
    %249 = arith.mulf %248, %233 : vector<8x64xf32>
    %250 = vector.extract_strided_slice %245 {offsets = [0, 0], sizes = [8, 64], strides = [1, 1]} : vector<8x192xf32> to vector<8x64xf32>
    %251 = arith.mulf %250, %247 : vector<8x64xf32>
    %252 = arith.addf %249, %251 : vector<8x64xf32>
    %253 = vector.extract_strided_slice %245 {offsets = [0, 128], sizes = [8, 64], strides = [1, 1]} : vector<8x192xf32> to vector<8x64xf32>
    %254 = math.tanh %252 : vector<8x64xf32>
    %255 = arith.mulf %253, %254 : vector<8x64xf32>
    %c32_75 = arith.constant 32 : index
    %c0_76 = arith.constant 0 : index
    %256 = vector.load %arg17[%c32_75, %c0_76] : memref<64x256xf32, #tpu.memory_space<vmem>>, vector<8x256xf32>
    %cst_77 = arith.constant dense<0.000000e+00> : vector<8x256xf32>
    %257 = tpu.matmul %255, %177, %cst_77 {dimension_numbers = #tpu.dot_dimension_numbers<[1], [0], [0], [1], [0, 0, 1, 1], [], []>} : vector<8x64xf32>, vector<64x256xf32>, vector<8x256xf32> -> vector<8x256xf32>
    %258 = arith.addf %256, %257 : vector<8x256xf32>
    %259 = vector.extract_strided_slice %258 {offsets = [0, 0], sizes = [8, 192], strides = [1, 1]} : vector<8x256xf32> to vector<8x192xf32>
    %260 = arith.negf %259 : vector<8x192xf32>
    %261 = math.exp %260 : vector<8x192xf32>
    %cst_78 = arith.constant 1.000000e+00 : f32
    %262 = vector.broadcast %cst_78 : f32 to vector<8x192xf32>
    %263 = arith.addf %262, %261 : vector<8x192xf32>
    %264 = arith.divf %262, %263 : vector<8x192xf32>
    %265 = vector.extract_strided_slice %258 {offsets = [0, 192], sizes = [8, 64], strides = [1, 1]} : vector<8x256xf32> to vector<8x64xf32>
    %266 = math.tanh %265 : vector<8x64xf32>
    %267 = vector.extract_strided_slice %264 {offsets = [0, 64], sizes = [8, 64], strides = [1, 1]} : vector<8x192xf32> to vector<8x64xf32>
    %268 = arith.mulf %267, %252 : vector<8x64xf32>
    %269 = vector.extract_strided_slice %264 {offsets = [0, 0], sizes = [8, 64], strides = [1, 1]} : vector<8x192xf32> to vector<8x64xf32>
    %270 = arith.mulf %269, %266 : vector<8x64xf32>
    %271 = arith.addf %268, %270 : vector<8x64xf32>
    %272 = vector.extract_strided_slice %264 {offsets = [0, 128], sizes = [8, 64], strides = [1, 1]} : vector<8x192xf32> to vector<8x64xf32>
    %273 = math.tanh %271 : vector<8x64xf32>
    %274 = arith.mulf %272, %273 : vector<8x64xf32>
    %c40_79 = arith.constant 40 : index
    %c0_80 = arith.constant 0 : index
    %275 = vector.load %arg17[%c40_79, %c0_80] : memref<64x256xf32, #tpu.memory_space<vmem>>, vector<8x256xf32>
    %cst_81 = arith.constant dense<0.000000e+00> : vector<8x256xf32>
    %276 = tpu.matmul %274, %177, %cst_81 {dimension_numbers = #tpu.dot_dimension_numbers<[1], [0], [0], [1], [0, 0, 1, 1], [], []>} : vector<8x64xf32>, vector<64x256xf32>, vector<8x256xf32> -> vector<8x256xf32>
    %277 = arith.addf %275, %276 : vector<8x256xf32>
    %278 = vector.extract_strided_slice %277 {offsets = [0, 0], sizes = [8, 192], strides = [1, 1]} : vector<8x256xf32> to vector<8x192xf32>
    %279 = arith.negf %278 : vector<8x192xf32>
    %280 = math.exp %279 : vector<8x192xf32>
    %cst_82 = arith.constant 1.000000e+00 : f32
    %281 = vector.broadcast %cst_82 : f32 to vector<8x192xf32>
    %282 = arith.addf %281, %280 : vector<8x192xf32>
    %283 = arith.divf %281, %282 : vector<8x192xf32>
    %284 = vector.extract_strided_slice %277 {offsets = [0, 192], sizes = [8, 64], strides = [1, 1]} : vector<8x256xf32> to vector<8x64xf32>
    %285 = math.tanh %284 : vector<8x64xf32>
    %286 = vector.extract_strided_slice %283 {offsets = [0, 64], sizes = [8, 64], strides = [1, 1]} : vector<8x192xf32> to vector<8x64xf32>
    %287 = arith.mulf %286, %271 : vector<8x64xf32>
    %288 = vector.extract_strided_slice %283 {offsets = [0, 0], sizes = [8, 64], strides = [1, 1]} : vector<8x192xf32> to vector<8x64xf32>
    %289 = arith.mulf %288, %285 : vector<8x64xf32>
    %290 = arith.addf %287, %289 : vector<8x64xf32>
    %291 = vector.extract_strided_slice %283 {offsets = [0, 128], sizes = [8, 64], strides = [1, 1]} : vector<8x192xf32> to vector<8x64xf32>
    %292 = math.tanh %290 : vector<8x64xf32>
    %293 = arith.mulf %291, %292 : vector<8x64xf32>
    %c48_83 = arith.constant 48 : index
    %c0_84 = arith.constant 0 : index
    %294 = vector.load %arg17[%c48_83, %c0_84] : memref<64x256xf32, #tpu.memory_space<vmem>>, vector<8x256xf32>
    %cst_85 = arith.constant dense<0.000000e+00> : vector<8x256xf32>
    %295 = tpu.matmul %293, %177, %cst_85 {dimension_numbers = #tpu.dot_dimension_numbers<[1], [0], [0], [1], [0, 0, 1, 1], [], []>} : vector<8x64xf32>, vector<64x256xf32>, vector<8x256xf32> -> vector<8x256xf32>
    %296 = arith.addf %294, %295 : vector<8x256xf32>
    %297 = vector.extract_strided_slice %296 {offsets = [0, 0], sizes = [8, 192], strides = [1, 1]} : vector<8x256xf32> to vector<8x192xf32>
    %298 = arith.negf %297 : vector<8x192xf32>
    %299 = math.exp %298 : vector<8x192xf32>
    %cst_86 = arith.constant 1.000000e+00 : f32
    %300 = vector.broadcast %cst_86 : f32 to vector<8x192xf32>
    %301 = arith.addf %300, %299 : vector<8x192xf32>
    %302 = arith.divf %300, %301 : vector<8x192xf32>
    %303 = vector.extract_strided_slice %296 {offsets = [0, 192], sizes = [8, 64], strides = [1, 1]} : vector<8x256xf32> to vector<8x64xf32>
    %304 = math.tanh %303 : vector<8x64xf32>
    %305 = vector.extract_strided_slice %302 {offsets = [0, 64], sizes = [8, 64], strides = [1, 1]} : vector<8x192xf32> to vector<8x64xf32>
    %306 = arith.mulf %305, %290 : vector<8x64xf32>
    %307 = vector.extract_strided_slice %302 {offsets = [0, 0], sizes = [8, 64], strides = [1, 1]} : vector<8x192xf32> to vector<8x64xf32>
    %308 = arith.mulf %307, %304 : vector<8x64xf32>
    %309 = arith.addf %306, %308 : vector<8x64xf32>
    %310 = vector.extract_strided_slice %302 {offsets = [0, 128], sizes = [8, 64], strides = [1, 1]} : vector<8x192xf32> to vector<8x64xf32>
    %311 = math.tanh %309 : vector<8x64xf32>
    %312 = arith.mulf %310, %311 : vector<8x64xf32>
    %c56_87 = arith.constant 56 : index
    %c0_88 = arith.constant 0 : index
    %313 = vector.load %arg17[%c56_87, %c0_88] : memref<64x256xf32, #tpu.memory_space<vmem>>, vector<8x256xf32>
    %cst_89 = arith.constant dense<0.000000e+00> : vector<8x256xf32>
    %314 = tpu.matmul %312, %177, %cst_89 {dimension_numbers = #tpu.dot_dimension_numbers<[1], [0], [0], [1], [0, 0, 1, 1], [], []>} : vector<8x64xf32>, vector<64x256xf32>, vector<8x256xf32> -> vector<8x256xf32>
    %315 = arith.addf %313, %314 : vector<8x256xf32>
    %316 = vector.extract_strided_slice %315 {offsets = [0, 0], sizes = [8, 192], strides = [1, 1]} : vector<8x256xf32> to vector<8x192xf32>
    %317 = arith.negf %316 : vector<8x192xf32>
    %318 = math.exp %317 : vector<8x192xf32>
    %cst_90 = arith.constant 1.000000e+00 : f32
    %319 = vector.broadcast %cst_90 : f32 to vector<8x192xf32>
    %320 = arith.addf %319, %318 : vector<8x192xf32>
    %321 = arith.divf %319, %320 : vector<8x192xf32>
    %322 = vector.extract_strided_slice %315 {offsets = [0, 192], sizes = [8, 64], strides = [1, 1]} : vector<8x256xf32> to vector<8x64xf32>
    %323 = math.tanh %322 : vector<8x64xf32>
    %324 = vector.extract_strided_slice %321 {offsets = [0, 64], sizes = [8, 64], strides = [1, 1]} : vector<8x192xf32> to vector<8x64xf32>
    %325 = arith.mulf %324, %309 : vector<8x64xf32>
    %326 = vector.extract_strided_slice %321 {offsets = [0, 0], sizes = [8, 64], strides = [1, 1]} : vector<8x192xf32> to vector<8x64xf32>
    %327 = arith.mulf %326, %323 : vector<8x64xf32>
    %328 = arith.addf %325, %327 : vector<8x64xf32>
    %329 = vector.extract_strided_slice %321 {offsets = [0, 128], sizes = [8, 64], strides = [1, 1]} : vector<8x192xf32> to vector<8x64xf32>
    %330 = math.tanh %328 : vector<8x64xf32>
    %331 = arith.mulf %329, %330 : vector<8x64xf32>
    %332 = vector.extract_strided_slice %331 {offsets = [0, 0], sizes = [8, 32], strides = [1, 1]} : vector<8x64xf32> to vector<8x32xf32>
    %333 = vector.extract_strided_slice %198 {offsets = [0, 32], sizes = [8, 32], strides = [1, 1]} : vector<8x64xf32> to vector<8x32xf32>
    %334 = arith.addf %332, %333 : vector<8x32xf32>
    %cst_91 = arith.constant 5.000000e-01 : f32
    %335 = vector.broadcast %cst_91 : f32 to vector<8x32xf32>
    %336 = arith.mulf %335, %334 : vector<8x32xf32>
    %c0_92 = arith.constant 0 : index
    %c0_93 = arith.constant 0 : index
    %337 = vector.load %arg14[%c0_92, %c0_93] : memref<32x4xf32, #tpu.memory_space<vmem>>, vector<32x4xf32>
    %cst_94 = arith.constant dense<0.000000e+00> : vector<8x4xf32>
    %338 = tpu.matmul %336, %337, %cst_94 {dimension_numbers = #tpu.dot_dimension_numbers<[1], [0], [0], [1], [0, 0, 1, 1], [], []>} : vector<8x32xf32>, vector<32x4xf32>, vector<8x4xf32> -> vector<8x4xf32>
    %c0_95 = arith.constant 0 : index
    %c0_96 = arith.constant 0 : index
    %339 = vector.load %arg15[%c0_95, %c0_96] : memref<1x4xf32, #tpu.memory_space<vmem>>, vector<1x4xf32>
    %340 = vector.broadcast %339 : vector<1x4xf32> to vector<8x4xf32>
    %341 = arith.addf %338, %340 : vector<8x4xf32>
    %c0_97 = arith.constant 0 : index
    %c0_98 = arith.constant 0 : index
    %342 = vector.load %arg16[%c0_97, %c0_98] : memref<8x4xf32, #tpu.memory_space<vmem>>, vector<8x4xf32>
    tpu.vector_store %arg16[%c0_97, %c0_98], %341 {strides = array<i32>} : memref<8x4xf32, #tpu.memory_space<vmem>>, vector<8x4xf32>,
    return
  }
}

</mosaic_0001>

<llo_original>
// kernel: bilstm_forward.1
$region0: #{bilstm_forward.1}
  #allocation0 [shape = 'u32[]', space=smem, size = 0x4, offset = 0x4, fixed_abs, tag = 'smem constant byte address 0x4 - core index']
  #allocation1 [shape = 'u32[72,128]{1,0:T(1,128)}', space=vmem, size = 0x9000, scoped, tag = 'internal scratch']
  #allocation2 [shape = 'f32[64,256]{1,0:T(8,128)}', space=vmem, size = 0x10000, scoped, tag = 'scratch operand']
  %s0 = inlined_call_operand.vmem [shape: f32[64,8], index: 0, kind: input, shape index: {}]
  %s1 = inlined_call_operand.vmem [shape: f32[64,8], index: 1, kind: input, shape index: {}]
  %s2 = inlined_call_operand.vmem [shape: f32[8,256], index: 2, kind: input, shape index: {}]
  %s3 = inlined_call_operand.vmem [shape: f32[8,256], index: 3, kind: input, shape index: {}]
  %s4 = inlined_call_operand.vmem [shape: f32[64,256], index: 4, kind: input, shape index: {}]
  %s5 = inlined_call_operand.vmem [shape: f32[1,256], index: 5, kind: input, shape index: {}]
  %s6 = inlined_call_operand.vmem [shape: f32[8,64], index: 6, kind: input, shape index: {}]
  %s7 = inlined_call_operand.vmem [shape: f32[8,64], index: 7, kind: input, shape index: {}]
  %s8 = inlined_call_operand.vmem [shape: f32[64,256], index: 8, kind: input, shape index: {}]
  %s9 = inlined_call_operand.vmem [shape: f32[64,256], index: 9, kind: input, shape index: {}]
  %s10 = inlined_call_operand.hbm [shape: f32[64,256], index: 10, kind: input, shape index: {}]
  %s11 = inlined_call_operand.vmem [shape: f32[1,256], index: 11, kind: input, shape index: {}]
  %s12 = inlined_call_operand.vmem [shape: f32[8,64], index: 12, kind: input, shape index: {}]
  %s13 = inlined_call_operand.vmem [shape: f32[8,64], index: 13, kind: input, shape index: {}]
  %s14 = inlined_call_operand.vmem [shape: f32[32,4], index: 14, kind: input, shape index: {}]
  %s15 = inlined_call_operand.vmem [shape: f32[1,4], index: 15, kind: input, shape index: {}]
  %s16 = inlined_call_operand.vmem [shape: f32[8,4], index: 16, kind: output, shape index: {}]
  %s17 = sld [smem:[#allocation0]]
  $region78: #{bilstm_forward.1} parent=0
    _
  %s19 = ssub.s32 1, %s17
  %s20 = scalar_select 0, %s19, %s17
  $region1: #{bilstm_forward.1} parent=0
    #allocation3 [shape = 'u8[65536]{0}', space=vmem, size = 0x10000, scoped, tag = 'input window, operand 10, single buffered']
    #allocation4 [shape = 's32[1]{0}', space=sflag, size = 0x4, scoped, tag = 'scoped memory for bilstm_forward.1']
    %21 = vsyncpa [#allocation4], 0
    // Predicated region
    $region2: #{bilstm_forward.1} parent=1 // pred_check
      _
    $region3: #{bilstm_forward.1} parent=1 // pred_check_branch
      %23 = sbr.rel (0) target = $region5
    $region4: #{bilstm_forward.1} parent=1 // pred_region
      _
    $region5: #{bilstm_forward.1} parent=1 // pred_fallthru
      _
    // Predicated region
    $region6: #{bilstm_forward.1} parent=1 // pred_check
      _
    $region7: #{bilstm_forward.1} parent=1 // pred_check_branch
      %25 = sbr.rel (0) target = $region9
    $region8: #{bilstm_forward.1} parent=1 // pred_region
      _
    $region9: #{bilstm_forward.1} parent=1 // pred_fallthru
      _
    // Predicated region
    $region10: #{bilstm_forward.1} parent=1 // pred_check
      _
    $region11: #{bilstm_forward.1} parent=1 // pred_check_branch
      %27 = sbr.rel (0) target = $region13
    $region12: #{bilstm_forward.1} parent=1 // pred_region
      _
    $region13: #{bilstm_forward.1} parent=1 // pred_fallthru
      _
    // Predicated region
    $region14: #{bilstm_forward.1} parent=1 // pred_check
      _
    $region15: #{bilstm_forward.1} parent=1 // pred_check_branch
      %29 = sbr.rel (0) target = $region17
    $region16: #{bilstm_forward.1} parent=1 // pred_region
      _
    $region17: #{bilstm_forward.1} parent=1 // pred_fallthru
      _
    // Predicated region
    $region18: #{bilstm_forward.1} parent=1 // pred_check
      _
    $region19: #{bilstm_forward.1} parent=1 // pred_check_branch
      %31 = sbr.rel (0) target = $region21
    $region20: #{bilstm_forward.1} parent=1 // pred_region
      _
    $region21: #{bilstm_forward.1} parent=1 // pred_fallthru
      _
    // Predicated region
    $region22: #{bilstm_forward.1} parent=1 // pred_check
      _
    $region23: #{bilstm_forward.1} parent=1 // pred_check_branch
      %33 = sbr.rel (0) target = $region25
    $region24: #{bilstm_forward.1} parent=1 // pred_region
      _
    $region25: #{bilstm_forward.1} parent=1 // pred_fallthru
      _
    // Predicated region
    $region26: #{bilstm_forward.1} parent=1 // pred_check
      _
    $region27: #{bilstm_forward.1} parent=1 // pred_check_branch
      %35 = sbr.rel (0) target = $region29
    $region28: #{bilstm_forward.1} parent=1 // pred_region
      _
    $region29: #{bilstm_forward.1} parent=1 // pred_fallthru
      _
    // Predicated region
    $region30: #{bilstm_forward.1} parent=1 // pred_check
      _
    $region31: #{bilstm_forward.1} parent=1 // pred_check_branch
      %37 = sbr.rel (0) target = $region33
    $region32: #{bilstm_forward.1} parent=1 // pred_region
      _
    $region33: #{bilstm_forward.1} parent=1 // pred_fallthru
      _
    // Predicated region
    $region34: #{bilstm_forward.1} parent=1 // pred_check
      _
    $region35: #{bilstm_forward.1} parent=1 // pred_check_branch
      %39 = sbr.rel (0) target = $region37
    $region36: #{bilstm_forward.1} parent=1 // pred_region
      _
    $region37: #{bilstm_forward.1} parent=1 // pred_fallthru
      _
    // Predicated region
    $region38: #{bilstm_forward.1} parent=1 // pred_check
      _
    $region39: #{bilstm_forward.1} parent=1 // pred_check_branch
      %41 = sbr.rel (0) target = $region41
    $region40: #{bilstm_forward.1} parent=1 // pred_region
      _
    $region41: #{bilstm_forward.1} parent=1 // pred_fallthru
      _
    // Predicated region
    $region42: #{bilstm_forward.1} parent=1 // pred_check
      _
    $region43: #{bilstm_forward.1} parent=1 // pred_check_branch
      %43 = sbr.rel (0) target = $region45
    $region44: #{bilstm_forward.1} parent=1 // pred_region
      %45 = vsyncadd [#allocation4], 0
      %s46 = sshll.u32 %s10, 4
      %s47 = int_to_ptr.hbm [resolvable:$true] %s46
      %s48 = sshll.u32 [#allocation3], 4
      %s49 = int_to_ptr.vmem [resolvable:$true] %s48
      %54 = dma.hbm_to_vmem [thread:$0]  %s47, 2048, %s49, [#allocation4], 256, 256, 16
    $region45: #{bilstm_forward.1} parent=1 // pred_fallthru
      _
    // Predicated region
    $region46: #{bilstm_forward.1} parent=1 // pred_check
      _
    $region47: #{bilstm_forward.1} parent=1 // pred_check_branch
      %56 = sbr.rel (0) target = $region49
    $region48: #{bilstm_forward.1} parent=1 // pred_region
      _
    $region49: #{bilstm_forward.1} parent=1 // pred_fallthru
      _
    // Predicated region
    $region50: #{bilstm_forward.1} parent=1 // pred_check
      _
    $region51: #{bilstm_forward.1} parent=1 // pred_check_branch
      %58 = sbr.rel (0) target = $region53
    $region52: #{bilstm_forward.1} parent=1 // pred_region
      _
    $region53: #{bilstm_forward.1} parent=1 // pred_fallthru
      _
    // Predicated region
    $region54: #{bilstm_forward.1} parent=1 // pred_check
      _
    $region55: #{bilstm_forward.1} parent=1 // pred_check_branch
      %60 = sbr.rel (0) target = $region57
    $region56: #{bilstm_forward.1} parent=1 // pred_region
      _
    $region57: #{bilstm_forward.1} parent=1 // pred_fallthru
      _
    // Predicated region
    $region58: #{bilstm_forward.1} parent=1 // pred_check
      _
    $region59: #{bilstm_forward.1} parent=1 // pred_check_branch
      %62 = sbr.rel (0) target = $region61
    $region60: #{bilstm_forward.1} parent=1 // pred_region
      _
    $region61: #{bilstm_forward.1} parent=1 // pred_fallthru
      _
    // Predicated region
    $region62: #{bilstm_forward.1} parent=1 // pred_check
      _
    $region63: #{bilstm_forward.1} parent=1 // pred_check_branch
      %64 = sbr.rel (0) target = $region65
    $region64: #{bilstm_forward.1} parent=1 // pred_region
      _
    $region65: #{bilstm_forward.1} parent=1 // pred_fallthru
      _
    // Predicated region
    $region66: #{bilstm_forward.1} parent=1 // pred_check
      _
    $region67: #{bilstm_forward.1} parent=1 // pred_check_branch
      %66 = sbr.rel (0) target = $region69
    $region68: #{bilstm_forward.1} parent=1 // pred_region
      %68 = dma.done [#allocation4], 2048
    $region69: #{bilstm_forward.1} parent=1 // pred_fallthru
      _
    %v69 = vld [vmem:[%s0] sm:$0xff]
    %v70 = vld [vmem:[%s0 + $0x8] sm:$0xff]
    %v71 = vld [vmem:[%s0 + $0x10] sm:$0xff]
    %v72 = vld [vmem:[%s0 + $0x18] sm:$0xff]
    %v73 = vld [vmem:[%s0 + $0x20] sm:$0xff]
    %v74 = vld [vmem:[%s0 + $0x28] sm:$0xff]
    %v75 = vld [vmem:[%s0 + $0x30] sm:$0xff]
    %v76 = vld [vmem:[%s0 + $0x38] sm:$0xff]
    %v77 = vld [vmem:[%s1] sm:$0xff]
    %v78 = vld [vmem:[%s1 + $0x8] sm:$0xff]
    %v79 = vld [vmem:[%s1 + $0x10] sm:$0xff]
    %v80 = vld [vmem:[%s1 + $0x18] sm:$0xff]
    %v81 = vld [vmem:[%s1 + $0x20] sm:$0xff]
    %v82 = vld [vmem:[%s1 + $0x28] sm:$0xff]
    %v83 = vld [vmem:[%s1 + $0x30] sm:$0xff]
    %v84 = vld [vmem:[%s1 + $0x38] sm:$0xff]
    %v85 = vld [vmem:[%s2] sm:$0xff]
    %v86 = vld [vmem:[%s2 + $0x8] sm:$0xff]
    %v87 = vld [vmem:[%s3] sm:$0xff]
    %v88 = vld [vmem:[%s3 + $0x8] sm:$0xff]
    %vm89 = vcmask 64512
    %v91 = vsel %vm89, %v77, 0
    %v94 = vsel %vm89, %v78, 0
    %v97 = vsel %vm89, %v79, 0
    %v100 = vsel %vm89, %v80, 0
    %v103 = vsel %vm89, %v81, 0
    %v106 = vsel %vm89, %v82, 0
    %v109 = vsel %vm89, %v83, 0
    %v112 = vsel %vm89, %v84, 0
    %114 = vmatpush.msra.mxu0 0.0
    %115 = vmatpush.msra.mxu0 0.0
    %116 = vmatpush.msra.mxu0 0.0
    %117 = vmatpush.msra.mxu0 0.0
    %118 = vmatpush.msra.mxu0 0.0
    %119 = vmatpush.msra.mxu0 0.0
    %120 = vmatpush.msra.mxu0 0.0
    %121 = vmatpush.msra.mxu0 0.0
    %122 = vmatpush.msra.mxu0 0.0
    %123 = vmatpush.msra.mxu0 0.0
    %124 = vmatpush.msra.mxu0 0.0
    %125 = vmatpush.msra.mxu0 0.0
    %126 = vmatpush.msra.mxu0 0.0
    %127 = vmatpush.msra.mxu0 0.0
    %128 = vmatpush.msra.mxu0 0.0
    %129 = vmatpush.msra.mxu0 %v87
    %130 = vmatmul.f32.gmra.mxu0 %v91
    %v131 = vpop.f32.mrf.mxu0
    %v132 = vadd.f32 0.0, %v131
    %133 = vmatmul.f32.gmra.mxu0 %v94
    %v134 = vpop.f32.mrf.mxu0
    %v135 = vadd.f32 0.0, %v134
    %136 = vmatmul.f32.gmra.mxu0 %v97
    %v137 = vpop.f32.mrf.mxu0
    %v138 = vadd.f32 0.0, %v137
    %139 = vmatmul.f32.gmra.mxu0 %v100
    %v140 = vpop.f32.mrf.mxu0
    %v141 = vadd.f32 0.0, %v140
    %142 = vmatmul.f32.gmra.mxu0 %v103
    %v143 = vpop.f32.mrf.mxu0
    %v144 = vadd.f32 0.0, %v143
    %145 = vmatmul.f32.gmra.mxu0 %v106
    %v146 = vpop.f32.mrf.mxu0
    %v147 = vadd.f32 0.0, %v146
    %148 = vmatmul.f32.gmra.mxu0 %v109
    %v149 = vpop.f32.mrf.mxu0
    %v150 = vadd.f32 0.0, %v149
    %151 = vmatmul.f32.gmra.mxu0 %v112
    %v152 = vpop.f32.mrf.mxu0
    %v153 = vadd.f32 0.0, %v152
    %154 = vdwg.mxu0
    %155 = vmatpush.msra.mxu0 0.0
    %156 = vmatpush.msra.mxu0 0.0
    %157 = vmatpush.msra.mxu0 0.0
    %158 = vmatpush.msra.mxu0 0.0
    %159 = vmatpush.msra.mxu0 0.0
    %160 = vmatpush.msra.mxu0 0.0
    %161 = vmatpush.msra.mxu0 0.0
    %162 = vmatpush.msra.mxu0 0.0
    %163 = vmatpush.msra.mxu0 0.0
    %164 = vmatpush.msra.mxu0 0.0
    %165 = vmatpush.msra.mxu0 0.0
    %166 = vmatpush.msra.mxu0 0.0
    %167 = vmatpush.msra.mxu0 0.0
    %168 = vmatpush.msra.mxu0 0.0
    %169 = vmatpush.msra.mxu0 0.0
    %170 = vmatpush.msra.mxu0 %v88
    %171 = vmatmul.f32.gmra.mxu0 %v91
    %v172 = vpop.f32.mrf.mxu0
    %v173 = vadd.f32 0.0, %v172
    %174 = vmatmul.f32.gmra.mxu0 %v94
    %v175 = vpop.f32.mrf.mxu0
    %v176 = vadd.f32 0.0, %v175
    %177 = vmatmul.f32.gmra.mxu0 %v97
    %v178 = vpop.f32.mrf.mxu0
    %v179 = vadd.f32 0.0, %v178
    %180 = vmatmul.f32.gmra.mxu0 %v100
    %v181 = vpop.f32.mrf.mxu0
    %v182 = vadd.f32 0.0, %v181
    %183 = vmatmul.f32.gmra.mxu0 %v103
    %v184 = vpop.f32.mrf.mxu0
    %v185 = vadd.f32 0.0, %v184
    %186 = vmatmul.f32.gmra.mxu0 %v106
    %v187 = vpop.f32.mrf.mxu0
    %v188 = vadd.f32 0.0, %v187
    %189 = vmatmul.f32.gmra.mxu0 %v109
    %v190 = vpop.f32.mrf.mxu0
    %v191 = vadd.f32 0.0, %v190
    %192 = vmatmul.f32.gmra.mxu0 %v112
    %v193 = vpop.f32.mrf.mxu0
    %v194 = vadd.f32 0.0, %v193
    %195 = vdwg.mxu0
    %v197 = vsel %vm89, %v69, 0
    %v200 = vsel %vm89, %v70, 0
    %v203 = vsel %vm89, %v71, 0
    %v206 = vsel %vm89, %v72, 0
    %v209 = vsel %vm89, %v73, 0
    %v212 = vsel %vm89, %v74, 0
    %v215 = vsel %vm89, %v75, 0
    %v218 = vsel %vm89, %v76, 0
    %220 = vmatpush.msra.mxu0 0.0
    %221 = vmatpush.msra.mxu0 0.0
    %222 = vmatpush.msra.mxu0 0.0
    %223 = vmatpush.msra.mxu0 0.0
    %224 = vmatpush.msra.mxu0 0.0
    %225 = vmatpush.msra.mxu0 0.0
    %226 = vmatpush.msra.mxu0 0.0
    %227 = vmatpush.msra.mxu0 0.0
    %228 = vmatpush.msra.mxu0 0.0
    %229 = vmatpush.msra.mxu0 0.0
    %230 = vmatpush.msra.mxu0 0.0
    %231 = vmatpush.msra.mxu0 0.0
    %232 = vmatpush.msra.mxu0 0.0
    %233 = vmatpush.msra.mxu0 0.0
    %234 = vmatpush.msra.mxu0 0.0
    %235 = vmatpush.msra.mxu0 %v85
    %236 = vmatmul.f32.gmra.mxu0 %v197
    %v237 = vpop.f32.mrf.mxu0
    %v238 = vadd.f32 %v132, %v237
    %239 = vmatmul.f32.gmra.mxu0 %v200
    %v240 = vpop.f32.mrf.mxu0
    %v241 = vadd.f32 %v135, %v240
    %242 = vmatmul.f32.gmra.mxu0 %v203
    %v243 = vpop.f32.mrf.mxu0
    %v244 = vadd.f32 %v138, %v243
    %245 = vmatmul.f32.gmra.mxu0 %v206
    %v246 = vpop.f32.mrf.mxu0
    %v247 = vadd.f32 %v141, %v246
    %248 = vmatmul.f32.gmra.mxu0 %v209
    %v249 = vpop.f32.mrf.mxu0
    %v250 = vadd.f32 %v144, %v249
    %251 = vmatmul.f32.gmra.mxu0 %v212
    %v252 = vpop.f32.mrf.mxu0
    %v253 = vadd.f32 %v147, %v252
    %254 = vmatmul.f32.gmra.mxu0 %v215
    %v255 = vpop.f32.mrf.mxu0
    %v256 = vadd.f32 %v150, %v255
    %257 = vmatmul.f32.gmra.mxu0 %v218
    %v258 = vpop.f32.mrf.mxu0
    %v259 = vadd.f32 %v153, %v258
    %260 = vdwg.mxu0
    %261 = vmatpush.msra.mxu0 0.0
    %262 = vmatpush.msra.mxu0 0.0
    %263 = vmatpush.msra.mxu0 0.0
    %264 = vmatpush.msra.mxu0 0.0
    %265 = vmatpush.msra.mxu0 0.0
    %266 = vmatpush.msra.mxu0 0.0
    %267 = vmatpush.msra.mxu0 0.0
    %268 = vmatpush.msra.mxu0 0.0
    %269 = vmatpush.msra.mxu0 0.0
    %270 = vmatpush.msra.mxu0 0.0
    %271 = vmatpush.msra.mxu0 0.0
    %272 = vmatpush.msra.mxu0 0.0
    %273 = vmatpush.msra.mxu0 0.0
    %274 = vmatpush.msra.mxu0 0.0
    %275 = vmatpush.msra.mxu0 0.0
    %276 = vmatpush.msra.mxu0 %v86
    %277 = vmatmul.f32.gmra.mxu0 %v197
    %v278 = vpop.f32.mrf.mxu0
    %v279 = vadd.f32 %v173, %v278
    %280 = vmatmul.f32.gmra.mxu0 %v200
    %v281 = vpop.f32.mrf.mxu0
    %v282 = vadd.f32 %v176, %v281
    %283 = vmatmul.f32.gmra.mxu0 %v203
    %v284 = vpop.f32.mrf.mxu0
    %v285 = vadd.f32 %v179, %v284
    %286 = vmatmul.f32.gmra.mxu0 %v206
    %v287 = vpop.f32.mrf.mxu0
    %v288 = vadd.f32 %v182, %v287
    %289 = vmatmul.f32.gmra.mxu0 %v209
    %v290 = vpop.f32.mrf.mxu0
    %v291 = vadd.f32 %v185, %v290
    %292 = vmatmul.f32.gmra.mxu0 %v212
    %v293 = vpop.f32.mrf.mxu0
    %v294 = vadd.f32 %v188, %v293
    %295 = vmatmul.f32.gmra.mxu0 %v215
    %v296 = vpop.f32.mrf.mxu0
    %v297 = vadd.f32 %v191, %v296
    %298 = vmatmul.f32.gmra.mxu0 %v218
    %v299 = vpop.f32.mrf.mxu0
    %v300 = vadd.f32 %v194, %v299
    %301 = vdwg.mxu0
    %v302 = vld [vmem:[%s5] sm:$0x3]
    %v304 = vperm.slane %v302, 0
    %v305 = vperm.slane %v302, 1
    %v308 = vadd.f32 %v238, %v304
    %v309 = vadd.f32 %v279, %v305
    %v310 = vadd.f32 %v241, %v304
    %v311 = vadd.f32 %v282, %v305
    %v312 = vadd.f32 %v244, %v304
    %v313 = vadd.f32 %v285, %v305
    %v314 = vadd.f32 %v247, %v304
    %v315 = vadd.f32 %v288, %v305
    %v316 = vadd.f32 %v250, %v304
    %v317 = vadd.f32 %v291, %v305
    %v318 = vadd.f32 %v253, %v304
    %v319 = vadd.f32 %v294, %v305
    %v320 = vadd.f32 %v256, %v304
    %v321 = vadd.f32 %v297, %v305
    %v322 = vadd.f32 %v259, %v304
    %v323 = vadd.f32 %v300, %v305
    %324 = vst [vmem:[#allocation2] sm:$0xff] %v308
    %325 = vst [vmem:[#allocation2 + $0x8] sm:$0xff] %v309
    %326 = vst [vmem:[#allocation2 + $0x10] sm:$0xff] %v310
    %327 = vst [vmem:[#allocation2 + $0x18] sm:$0xff] %v311
    %328 = vst [vmem:[#allocation2 + $0x20] sm:$0xff] %v312
    %329 = vst [vmem:[#allocation2 + $0x28] sm:$0xff] %v313
    %330 = vst [vmem:[#allocation2 + $0x30] sm:$0xff] %v314
    %331 = vst [vmem:[#allocation2 + $0x38] sm:$0xff] %v315
    %332 = vst [vmem:[#allocation2 + $0x40] sm:$0xff] %v316
    %333 = vst [vmem:[#allocation2 + $0x48] sm:$0xff] %v317
    %334 = vst [vmem:[#allocation2 + $0x50] sm:$0xff] %v318
    %335 = vst [vmem:[#allocation2 + $0x58] sm:$0xff] %v319
    %336 = vst [vmem:[#allocation2 + $0x60] sm:$0xff] %v320
    %337 = vst [vmem:[#allocation2 + $0x68] sm:$0xff] %v321
    %338 = vst [vmem:[#allocation2 + $0x70] sm:$0xff] %v322
    %339 = vst [vmem:[#allocation2 + $0x78] sm:$0xff] %v323
    %v340 = vld [vmem:[%s4] sm:$0xff]
    %v341 = vld [vmem:[%s4 + $0x8] sm:$0xff]
    %v342 = vld [vmem:[%s4 + $0x10] sm:$0xff]
    %v343 = vld [vmem:[%s4 + $0x18] sm:$0xff]
    %v344 = vld [vmem:[%s4 + $0x20] sm:$0xff]
    %v345 = vld [vmem:[%s4 + $0x28] sm:$0xff]
    %v346 = vld [vmem:[%s4 + $0x30] sm:$0xff]
    %v347 = vld [vmem:[%s4 + $0x38] sm:$0xff]
    %v348 = vld [vmem:[%s4 + $0x40] sm:$0xff]
    %v349 = vld [vmem:[%s4 + $0x48] sm:$0xff]
    %v350 = vld [vmem:[%s4 + $0x50] sm:$0xff]
    %v351 = vld [vmem:[%s4 + $0x58] sm:$0xff]
    %v352 = vld [vmem:[%s4 + $0x60] sm:$0xff]
    %v353 = vld [vmem:[%s4 + $0x68] sm:$0xff]
    %v354 = vld [vmem:[%s4 + $0x70] sm:$0xff]
    %v355 = vld [vmem:[%s4 + $0x78] sm:$0xff]
    %v356 = vld [vmem:[%s6] sm:$0xff]
    %v357 = vld [vmem:[%s7] sm:$0xff]
    %v358 = vld [vmem:[#allocation2] sm:$0xff]
    %v359 = vld [vmem:[#allocation2 + $0x8] sm:$0xff]
    %vm360 = vcmask 523264
    %v362 = vsel %vm360, %v356, 0
    %364 = vmatpush.msra.mxu0 0.0
    %365 = vmatpush.msra.mxu0 0.0
    %366 = vmatpush.msra.mxu0 0.0
    %367 = vmatpush.msra.mxu0 0.0
    %368 = vmatpush.msra.mxu0 0.0
    %369 = vmatpush.msra.mxu0 0.0
    %370 = vmatpush.msra.mxu0 0.0
    %371 = vmatpush.msra.mxu0 0.0
    %372 = vmatpush.msra.mxu0 %v354
    %373 = vmatpush.msra.mxu0 %v352
    %374 = vmatpush.msra.mxu0 %v350
    %375 = vmatpush.msra.mxu0 %v348
    %376 = vmatpush.msra.mxu0 %v346
    %377 = vmatpush.msra.mxu0 %v344
    %378 = vmatpush.msra.mxu0 %v342
    %379 = vmatpush.msra.mxu0 %v340
    %380 = vmatmul.f32.gmra.mxu0 %v362
    %v381 = vpop.f32.mrf.mxu0
    %v382 = vadd.f32 0.0, %v381
    %383 = vdwg.mxu0
    %384 = vmatpush.msra.mxu0 0.0
    %385 = vmatpush.msra.mxu0 0.0
    %386 = vmatpush.msra.mxu0 0.0
    %387 = vmatpush.msra.mxu0 0.0
    %388 = vmatpush.msra.mxu0 0.0
    %389 = vmatpush.msra.mxu0 0.0
    %390 = vmatpush.msra.mxu0 0.0
    %391 = vmatpush.msra.mxu0 0.0
    %392 = vmatpush.msra.mxu0 %v355
    %393 = vmatpush.msra.mxu0 %v353
    %394 = vmatpush.msra.mxu0 %v351
    %395 = vmatpush.msra.mxu0 %v349
    %396 = vmatpush.msra.mxu0 %v347
    %397 = vmatpush.msra.mxu0 %v345
    %398 = vmatpush.msra.mxu0 %v343
    %399 = vmatpush.msra.mxu0 %v341
    %400 = vmatmul.f32.gmra.mxu0 %v362
    %v401 = vpop.f32.mrf.mxu0
    %v402 = vadd.f32 0.0, %v401
    %403 = vdwg.mxu0
    %v404 = vadd.f32 %v358, %v382
    %v405 = vadd.f32 %v359, %v402
    %v406 = vxor.u32 %v404, 2147483648
    %v407 = vxor.u32 %v405, 2147483648
    %v408 = vmul.f32 %v406, 1.442695
    %v409 = vpow.pop %v408
    %v410 = vmul.f32 %v407, 1.442695
    %v411 = vpow.pop %v410
    %v412 = vadd.f32 %v409, 1.0
    %v413 = vadd.f32 %v411, 1.0
    %v414 = vrcp.pop %v412
    %v415 = vmul.f32 %v412, %v414
    %v416 = vsub.f32 1.0, %v415
    %v417 = vmul.f32 %v414, %v416
    %v418 = vadd.f32 %v414, %v417
    %vm419 = vweird.f32 %v412
    %vm420 = vweird.f32 %v414
    %vm421 = vmor %vm419, %vm420
    %v422 = vsel %vm421, %v414, %v418
    %v423 = vand.u32 2147483647, %v412
    %vm424 = vcmp.eq.f32.partialorder %v423, 8.507059e+37
    %v425 = vand.u32 %v412, 2147483648
    %v426 = vor.u32 1.1754944e-38, %v425
    %v427 = vsel %vm424, %v426, %v422
    %v428 = vmul.f32 1.0, %v427
    %v429 = vrcp.pop %v413
    %v430 = vmul.f32 %v413, %v429
    %v431 = vsub.f32 1.0, %v430
    %v432 = vmul.f32 %v429, %v431
    %v433 = vadd.f32 %v429, %v432
    %vm434 = vweird.f32 %v413
    %vm435 = vweird.f32 %v429
    %vm436 = vmor %vm434, %vm435
    %v437 = vsel %vm436, %v429, %v433
    %v438 = vand.u32 2147483647, %v413
    %vm439 = vcmp.eq.f32.partialorder %v438, 8.507059e+37
    %v440 = vand.u32 %v413, 2147483648
    %v441 = vor.u32 1.1754944e-38, %v440
    %v442 = vsel %vm439, %v441, %v437
    %v443 = vmul.f32 1.0, %v442
    %v444 = vtanh.pop %v405
    %446 = vrot.lane.b32.xlu0 %v357, 64
    %v447 = vpop.permute.xlu0 %446
    %v449 = vmul.f32 %v428, %v447
    %451 = vrot.lane.b32.xlu0 %v444, 64
    %v452 = vpop.permute.xlu0 %451
    %v454 = vmul.f32 %v428, %v452
    %456 = vrot.lane.b32.xlu0 %v454, 64
    %v457 = vpop.permute.xlu0 %456
    %v459 = vadd.f32 %v449, %v457
    %v460 = vtanh.pop %v459
    %462 = vrot.lane.b32.xlu0 %v460, 64
    %v463 = vpop.permute.xlu0 %462
    %v465 = vmul.f32 %v443, %v463
    %v466 = vld [vmem:[#allocation2 + $0x10] sm:$0xff]
    %v467 = vld [vmem:[#allocation2 + $0x18] sm:$0xff]
    %v469 = vsel %vm360, %v465, 0
    %471 = vmatpush.msra.mxu0 0.0
    %472 = vmatpush.msra.mxu0 0.0
    %473 = vmatpush.msra.mxu0 0.0
    %474 = vmatpush.msra.mxu0 0.0
    %475 = vmatpush.msra.mxu0 0.0
    %476 = vmatpush.msra.mxu0 0.0
    %477 = vmatpush.msra.mxu0 0.0
    %478 = vmatpush.msra.mxu0 0.0
    %479 = vmatpush.msra.mxu0 %v354
    %480 = vmatpush.msra.mxu0 %v352
    %481 = vmatpush.msra.mxu0 %v350
    %482 = vmatpush.msra.mxu0 %v348
    %483 = vmatpush.msra.mxu0 %v346
    %484 = vmatpush.msra.mxu0 %v344
    %485 = vmatpush.msra.mxu0 %v342
    %486 = vmatpush.msra.mxu0 %v340
    %487 = vmatmul.f32.gmra.mxu0 %v469
    %v488 = vpop.f32.mrf.mxu0
    %v489 = vadd.f32 0.0, %v488
    %490 = vdwg.mxu0
    %491 = vmatpush.msra.mxu0 0.0
    %492 = vmatpush.msra.mxu0 0.0
    %493 = vmatpush.msra.mxu0 0.0
    %494 = vmatpush.msra.mxu0 0.0
    %495 = vmatpush.msra.mxu0 0.0
    %496 = vmatpush.msra.mxu0 0.0
    %497 = vmatpush.msra.mxu0 0.0
    %498 = vmatpush.msra.mxu0 0.0
    %499 = vmatpush.msra.mxu0 %v355
    %500 = vmatpush.msra.mxu0 %v353
    %501 = vmatpush.msra.mxu0 %v351
    %502 = vmatpush.msra.mxu0 %v349
    %503 = vmatpush.msra.mxu0 %v347
    %504 = vmatpush.msra.mxu0 %v345
    %505 = vmatpush.msra.mxu0 %v343
    %506 = vmatpush.msra.mxu0 %v341
    %507 = vmatmul.f32.gmra.mxu0 %v469
    %v508 = vpop.f32.mrf.mxu0
    %v509 = vadd.f32 0.0, %v508
    %510 = vdwg.mxu0
    %v511 = vadd.f32 %v466, %v489
    %v512 = vadd.f32 %v467, %v509
    %v513 = vxor.u32 %v511, 2147483648
    %v514 = vxor.u32 %v512, 2147483648
    %v515 = vmul.f32 %v513, 1.442695
    %v516 = vpow.pop %v515
    %v517 = vmul.f32 %v514, 1.442695
    %v518 = vpow.pop %v517
    %v519 = vadd.f32 %v516, 1.0
    %v520 = vadd.f32 %v518, 1.0
    %v521 = vrcp.pop %v519
    %v522 = vmul.f32 %v519, %v521
    %v523 = vsub.f32 1.0, %v522
    %v524 = vmul.f32 %v521, %v523
    %v525 = vadd.f32 %v521, %v524
    %vm526 = vweird.f32 %v519
    %vm527 = vweird.f32 %v521
    %vm528 = vmor %vm526, %vm527
    %v529 = vsel %vm528, %v521, %v525
    %v530 = vand.u32 2147483647, %v519
    %vm531 = vcmp.eq.f32.partialorder %v530, 8.507059e+37
    %v532 = vand.u32 %v519, 2147483648
    %v533 = vor.u32 1.1754944e-38, %v532
    %v534 = vsel %vm531, %v533, %v529
    %v535 = vmul.f32 1.0, %v534
    %v536 = vrcp.pop %v520
    %v537 = vmul.f32 %v520, %v536
    %v538 = vsub.f32 1.0, %v537
    %v539 = vmul.f32 %v536, %v538
    %v540 = vadd.f32 %v536, %v539
    %vm541 = vweird.f32 %v520
    %vm542 = vweird.f32 %v536
    %vm543 = vmor %vm541, %vm542
    %v544 = vsel %vm543, %v536, %v540
    %v545 = vand.u32 2147483647, %v520
    %vm546 = vcmp.eq.f32.partialorder %v545, 8.507059e+37
    %v547 = vand.u32 %v520, 2147483648
    %v548 = vor.u32 1.1754944e-38, %v547
    %v549 = vsel %vm546, %v548, %v544
    %v550 = vmul.f32 1.0, %v549
    %v551 = vtanh.pop %v512
    %v552 = vmul.f32 %v535, %v459
    %554 = vrot.lane.b32.xlu0 %v551, 64
    %v555 = vpop.permute.xlu0 %554
    %v557 = vmul.f32 %v535, %v555
    %559 = vrot.lane.b32.xlu0 %v557, 64
    %v560 = vpop.permute.xlu0 %559
    %v562 = vadd.f32 %v552, %v560
    %v563 = vtanh.pop %v562
    %565 = vrot.lane.b32.xlu0 %v563, 64
    %v566 = vpop.permute.xlu0 %565
    %v568 = vmul.f32 %v550, %v566
    %v569 = vld [vmem:[#allocation2 + $0x20] sm:$0xff]
    %v570 = vld [vmem:[#allocation2 + $0x28] sm:$0xff]
    %v572 = vsel %vm360, %v568, 0
    %574 = vmatpush.msra.mxu0 0.0
    %575 = vmatpush.msra.mxu0 0.0
    %576 = vmatpush.msra.mxu0 0.0
    %577 = vmatpush.msra.mxu0 0.0
    %578 = vmatpush.msra.mxu0 0.0
    %579 = vmatpush.msra.mxu0 0.0
    %580 = vmatpush.msra.mxu0 0.0
    %581 = vmatpush.msra.mxu0 0.0
    %582 = vmatpush.msra.mxu0 %v354
    %583 = vmatpush.msra.mxu0 %v352
    %584 = vmatpush.msra.mxu0 %v350
    %585 = vmatpush.msra.mxu0 %v348
    %586 = vmatpush.msra.mxu0 %v346
    %587 = vmatpush.msra.mxu0 %v344
    %588 = vmatpush.msra.mxu0 %v342
    %589 = vmatpush.msra.mxu0 %v340
    %590 = vmatmul.f32.gmra.mxu0 %v572
    %v591 = vpop.f32.mrf.mxu0
    %v592 = vadd.f32 0.0, %v591
    %593 = vdwg.mxu0
    %594 = vmatpush.msra.mxu0 0.0
    %595 = vmatpush.msra.mxu0 0.0
    %596 = vmatpush.msra.mxu0 0.0
    %597 = vmatpush.msra.mxu0 0.0
    %598 = vmatpush.msra.mxu0 0.0
    %599 = vmatpush.msra.mxu0 0.0
    %600 = vmatpush.msra.mxu0 0.0
    %601 = vmatpush.msra.mxu0 0.0
    %602 = vmatpush.msra.mxu0 %v355
    %603 = vmatpush.msra.mxu0 %v353
    %604 = vmatpush.msra.mxu0 %v351
    %605 = vmatpush.msra.mxu0 %v349
    %606 = vmatpush.msra.mxu0 %v347
    %607 = vmatpush.msra.mxu0 %v345
    %608 = vmatpush.msra.mxu0 %v343
    %609 = vmatpush.msra.mxu0 %v341
    %610 = vmatmul.f32.gmra.mxu0 %v572
    %v611 = vpop.f32.mrf.mxu0
    %v612 = vadd.f32 0.0, %v611
    %613 = vdwg.mxu0
    %v614 = vadd.f32 %v569, %v592
    %v615 = vadd.f32 %v570, %v612
    %v616 = vxor.u32 %v614, 2147483648
    %v617 = vxor.u32 %v615, 2147483648
    %v618 = vmul.f32 %v616, 1.442695
    %v619 = vpow.pop %v618
    %v620 = vmul.f32 %v617, 1.442695
    %v621 = vpow.pop %v620
    %v622 = vadd.f32 %v619, 1.0
    %v623 = vadd.f32 %v621, 1.0
    %v624 = vrcp.pop %v622
    %v625 = vmul.f32 %v622, %v624
    %v626 = vsub.f32 1.0, %v625
    %v627 = vmul.f32 %v624, %v626
    %v628 = vadd.f32 %v624, %v627
    %vm629 = vweird.f32 %v622
    %vm630 = vweird.f32 %v624
    %vm631 = vmor %vm629, %vm630
    %v632 = vsel %vm631, %v624, %v628
    %v633 = vand.u32 2147483647, %v622
    %vm634 = vcmp.eq.f32.partialorder %v633, 8.507059e+37
    %v635 = vand.u32 %v622, 2147483648
    %v636 = vor.u32 1.1754944e-38, %v635
    %v637 = vsel %vm634, %v636, %v632
    %v638 = vmul.f32 1.0, %v637
    %v639 = vrcp.pop %v623
    %v640 = vmul.f32 %v623, %v639
    %v641 = vsub.f32 1.0, %v640
    %v642 = vmul.f32 %v639, %v641
    %v643 = vadd.f32 %v639, %v642
    %vm644 = vweird.f32 %v623
    %vm645 = vweird.f32 %v639
    %vm646 = vmor %vm644, %vm645
    %v647 = vsel %vm646, %v639, %v643
    %v648 = vand.u32 2147483647, %v623
    %vm649 = vcmp.eq.f32.partialorder %v648, 8.507059e+37
    %v650 = vand.u32 %v623, 2147483648
    %v651 = vor.u32 1.1754944e-38, %v650
    %v652 = vsel %vm649, %v651, %v647
    %v653 = vmul.f32 1.0, %v652
    %v654 = vtanh.pop %v615
    %v655 = vmul.f32 %v638, %v562
    %657 = vrot.lane.b32.xlu0 %v654, 64
    %v658 = vpop.permute.xlu0 %657
    %v660 = vmul.f32 %v638, %v658
    %662 = vrot.lane.b32.xlu0 %v660, 64
    %v663 = vpop.permute.xlu0 %662
    %v665 = vadd.f32 %v655, %v663
    %v666 = vtanh.pop %v665
    %668 = vrot.lane.b32.xlu0 %v666, 64
    %v669 = vpop.permute.xlu0 %668
    %v671 = vmul.f32 %v653, %v669
    %v672 = vld [vmem:[#allocation2 + $0x30] sm:$0xff]
    %v673 = vld [vmem:[#allocation2 + $0x38] sm:$0xff]
    %v675 = vsel %vm360, %v671, 0
    %677 = vmatpush.msra.mxu0 0.0
    %678 = vmatpush.msra.mxu0 0.0
    %679 = vmatpush.msra.mxu0 0.0
    %680 = vmatpush.msra.mxu0 0.0
    %681 = vmatpush.msra.mxu0 0.0
    %682 = vmatpush.msra.mxu0 0.0
    %683 = vmatpush.msra.mxu0 0.0
    %684 = vmatpush.msra.mxu0 0.0
    %685 = vmatpush.msra.mxu0 %v354
    %686 = vmatpush.msra.mxu0 %v352
    %687 = vmatpush.msra.mxu0 %v350
    %688 = vmatpush.msra.mxu0 %v348
    %689 = vmatpush.msra.mxu0 %v346
    %690 = vmatpush.msra.mxu0 %v344
    %691 = vmatpush.msra.mxu0 %v342
    %692 = vmatpush.msra.mxu0 %v340
    %693 = vmatmul.f32.gmra.mxu0 %v675
    %v694 = vpop.f32.mrf.mxu0
    %v695 = vadd.f32 0.0, %v694
    %696 = vdwg.mxu0
    %697 = vmatpush.msra.mxu0 0.0
    %698 = vmatpush.msra.mxu0 0.0
    %699 = vmatpush.msra.mxu0 0.0
    %700 = vmatpush.msra.mxu0 0.0
    %701 = vmatpush.msra.mxu0 0.0
    %702 = vmatpush.msra.mxu0 0.0
    %703 = vmatpush.msra.mxu0 0.0
    %704 = vmatpush.msra.mxu0 0.0
    %705 = vmatpush.msra.mxu0 %v355
    %706 = vmatpush.msra.mxu0 %v353
    %707 = vmatpush.msra.mxu0 %v351
    %708 = vmatpush.msra.mxu0 %v349
    %709 = vmatpush.msra.mxu0 %v347
    %710 = vmatpush.msra.mxu0 %v345
    %711 = vmatpush.msra.mxu0 %v343
    %712 = vmatpush.msra.mxu0 %v341
    %713 = vmatmul.f32.gmra.mxu0 %v675
    %v714 = vpop.f32.mrf.mxu0
    %v715 = vadd.f32 0.0, %v714
    %716 = vdwg.mxu0
    %v717 = vadd.f32 %v672, %v695
    %v718 = vadd.f32 %v673, %v715
    %v719 = vxor.u32 %v717, 2147483648
    %v720 = vxor.u32 %v718, 2147483648
    %v721 = vmul.f32 %v719, 1.442695
    %v722 = vpow.pop %v721
    %v723 = vmul.f32 %v720, 1.442695
    %v724 = vpow.pop %v723
    %v725 = vadd.f32 %v722, 1.0
    %v726 = vadd.f32 %v724, 1.0
    %v727 = vrcp.pop %v725
    %v728 = vmul.f32 %v725, %v727
    %v729 = vsub.f32 1.0, %v728
    %v730 = vmul.f32 %v727, %v729
    %v731 = vadd.f32 %v727, %v730
    %vm732 = vweird.f32 %v725
    %vm733 = vweird.f32 %v727
    %vm734 = vmor %vm732, %vm733
    %v735 = vsel %vm734, %v727, %v731
    %v736 = vand.u32 2147483647, %v725
    %vm737 = vcmp.eq.f32.partialorder %v736, 8.507059e+37
    %v738 = vand.u32 %v725, 2147483648
    %v739 = vor.u32 1.1754944e-38, %v738
    %v740 = vsel %vm737, %v739, %v735
    %v741 = vmul.f32 1.0, %v740
    %v742 = vrcp.pop %v726
    %v743 = vmul.f32 %v726, %v742
    %v744 = vsub.f32 1.0, %v743
    %v745 = vmul.f32 %v742, %v744
    %v746 = vadd.f32 %v742, %v745
    %vm747 = vweird.f32 %v726
    %vm748 = vweird.f32 %v742
    %vm749 = vmor %vm747, %vm748
    %v750 = vsel %vm749, %v742, %v746
    %v751 = vand.u32 2147483647, %v726
    %vm752 = vcmp.eq.f32.partialorder %v751, 8.507059e+37
    %v753 = vand.u32 %v726, 2147483648
    %v754 = vor.u32 1.1754944e-38, %v753
    %v755 = vsel %vm752, %v754, %v750
    %v756 = vmul.f32 1.0, %v755
    %v757 = vtanh.pop %v718
    %v758 = vmul.f32 %v741, %v665
    %760 = vrot.lane.b32.xlu0 %v757, 64
    %v761 = vpop.permute.xlu0 %760
    %v763 = vmul.f32 %v741, %v761
    %765 = vrot.lane.b32.xlu0 %v763, 64
    %v766 = vpop.permute.xlu0 %765
    %v768 = vadd.f32 %v758, %v766
    %v769 = vtanh.pop %v768
    %771 = vrot.lane.b32.xlu0 %v769, 64
    %v772 = vpop.permute.xlu0 %771
    %v774 = vmul.f32 %v756, %v772
    %v775 = vld [vmem:[#allocation2 + $0x40] sm:$0xff]
    %v776 = vld [vmem:[#allocation2 + $0x48] sm:$0xff]
    %v778 = vsel %vm360, %v774, 0
    %780 = vmatpush.msra.mxu0 0.0
    %781 = vmatpush.msra.mxu0 0.0
    %782 = vmatpush.msra.mxu0 0.0
    %783 = vmatpush.msra.mxu0 0.0
    %784 = vmatpush.msra.mxu0 0.0
    %785 = vmatpush.msra.mxu0 0.0
    %786 = vmatpush.msra.mxu0 0.0
    %787 = vmatpush.msra.mxu0 0.0
    %788 = vmatpush.msra.mxu0 %v354
    %789 = vmatpush.msra.mxu0 %v352
    %790 = vmatpush.msra.mxu0 %v350
    %791 = vmatpush.msra.mxu0 %v348
    %792 = vmatpush.msra.mxu0 %v346
    %793 = vmatpush.msra.mxu0 %v344
    %794 = vmatpush.msra.mxu0 %v342
    %795 = vmatpush.msra.mxu0 %v340
    %796 = vmatmul.f32.gmra.mxu0 %v778
    %v797 = vpop.f32.mrf.mxu0
    %v798 = vadd.f32 0.0, %v797
    %799 = vdwg.mxu0
    %800 = vmatpush.msra.mxu0 0.0
    %801 = vmatpush.msra.mxu0 0.0
    %802 = vmatpush.msra.mxu0 0.0
    %803 = vmatpush.msra.mxu0 0.0
    %804 = vmatpush.msra.mxu0 0.0
    %805 = vmatpush.msra.mxu0 0.0
    %806 = vmatpush.msra.mxu0 0.0
    %807 = vmatpush.msra.mxu0 0.0
    %808 = vmatpush.msra.mxu0 %v355
    %809 = vmatpush.msra.mxu0 %v353
    %810 = vmatpush.msra.mxu0 %v351
    %811 = vmatpush.msra.mxu0 %v349
    %812 = vmatpush.msra.mxu0 %v347
    %813 = vmatpush.msra.mxu0 %v345
    %814 = vmatpush.msra.mxu0 %v343
    %815 = vmatpush.msra.mxu0 %v341
    %816 = vmatmul.f32.gmra.mxu0 %v778
    %v817 = vpop.f32.mrf.mxu0
    %v818 = vadd.f32 0.0, %v817
    %819 = vdwg.mxu0
    %v820 = vadd.f32 %v775, %v798
    %v821 = vadd.f32 %v776, %v818
    %v822 = vxor.u32 %v820, 2147483648
    %v823 = vxor.u32 %v821, 2147483648
    %v824 = vmul.f32 %v822, 1.442695
    %v825 = vpow.pop %v824
    %v826 = vmul.f32 %v823, 1.442695
    %v827 = vpow.pop %v826
    %v828 = vadd.f32 %v825, 1.0
    %v829 = vadd.f32 %v827, 1.0
    %v830 = vrcp.pop %v828
    %v831 = vmul.f32 %v828, %v830
    %v832 = vsub.f32 1.0, %v831
    %v833 = vmul.f32 %v830, %v832
    %v834 = vadd.f32 %v830, %v833
    %vm835 = vweird.f32 %v828
    %vm836 = vweird.f32 %v830
    %vm837 = vmor %vm835, %vm836
    %v838 = vsel %vm837, %v830, %v834
    %v839 = vand.u32 2147483647, %v828
    %vm840 = vcmp.eq.f32.partialorder %v839, 8.507059e+37
    %v841 = vand.u32 %v828, 2147483648
    %v842 = vor.u32 1.1754944e-38, %v841
    %v843 = vsel %vm840, %v842, %v838
    %v844 = vmul.f32 1.0, %v843
    %v845 = vrcp.pop %v829
    %v846 = vmul.f32 %v829, %v845
    %v847 = vsub.f32 1.0, %v846
    %v848 = vmul.f32 %v845, %v847
    %v849 = vadd.f32 %v845, %v848
    %vm850 = vweird.f32 %v829
    %vm851 = vweird.f32 %v845
    %vm852 = vmor %vm850, %vm851
    %v853 = vsel %vm852, %v845, %v849
    %v854 = vand.u32 2147483647, %v829
    %vm855 = vcmp.eq.f32.partialorder %v854, 8.507059e+37
    %v856 = vand.u32 %v829, 2147483648
    %v857 = vor.u32 1.1754944e-38, %v856
    %v858 = vsel %vm855, %v857, %v853
    %v859 = vmul.f32 1.0, %v858
    %v860 = vtanh.pop %v821
    %v861 = vmul.f32 %v844, %v768
    %863 = vrot.lane.b32.xlu0 %v860, 64
    %v864 = vpop.permute.xlu0 %863
    %v866 = vmul.f32 %v844, %v864
    %868 = vrot.lane.b32.xlu0 %v866, 64
    %v869 = vpop.permute.xlu0 %868
    %v871 = vadd.f32 %v861, %v869
    %v872 = vtanh.pop %v871
    %874 = vrot.lane.b32.xlu0 %v872, 64
    %v875 = vpop.permute.xlu0 %874
    %v877 = vmul.f32 %v859, %v875
    %v878 = vld [vmem:[#allocation2 + $0x50] sm:$0xff]
    %v879 = vld [vmem:[#allocation2 + $0x58] sm:$0xff]
    %v881 = vsel %vm360, %v877, 0
    %883 = vmatpush.msra.mxu0 0.0
    %884 = vmatpush.msra.mxu0 0.0
    %885 = vmatpush.msra.mxu0 0.0
    %886 = vmatpush.msra.mxu0 0.0
    %887 = vmatpush.msra.mxu0 0.0
    %888 = vmatpush.msra.mxu0 0.0
    %889 = vmatpush.msra.mxu0 0.0
    %890 = vmatpush.msra.mxu0 0.0
    %891 = vmatpush.msra.mxu0 %v354
    %892 = vmatpush.msra.mxu0 %v352
    %893 = vmatpush.msra.mxu0 %v350
    %894 = vmatpush.msra.mxu0 %v348
    %895 = vmatpush.msra.mxu0 %v346
    %896 = vmatpush.msra.mxu0 %v344
    %897 = vmatpush.msra.mxu0 %v342
    %898 = vmatpush.msra.mxu0 %v340
    %899 = vmatmul.f32.gmra.mxu0 %v881
    %v900 = vpop.f32.mrf.mxu0
    %v901 = vadd.f32 0.0, %v900
    %902 = vdwg.mxu0
    %903 = vmatpush.msra.mxu0 0.0
    %904 = vmatpush.msra.mxu0 0.0
    %905 = vmatpush.msra.mxu0 0.0
    %906 = vmatpush.msra.mxu0 0.0
    %907 = vmatpush.msra.mxu0 0.0
    %908 = vmatpush.msra.mxu0 0.0
    %909 = vmatpush.msra.mxu0 0.0
    %910 = vmatpush.msra.mxu0 0.0
    %911 = vmatpush.msra.mxu0 %v355
    %912 = vmatpush.msra.mxu0 %v353
    %913 = vmatpush.msra.mxu0 %v351
    %914 = vmatpush.msra.mxu0 %v349
    %915 = vmatpush.msra.mxu0 %v347
    %916 = vmatpush.msra.mxu0 %v345
    %917 = vmatpush.msra.mxu0 %v343
    %918 = vmatpush.msra.mxu0 %v341
    %919 = vmatmul.f32.gmra.mxu0 %v881
    %v920 = vpop.f32.mrf.mxu0
    %v921 = vadd.f32 0.0, %v920
    %922 = vdwg.mxu0
    %v923 = vadd.f32 %v878, %v901
    %v924 = vadd.f32 %v879, %v921
    %v925 = vxor.u32 %v923, 2147483648
    %v926 = vxor.u32 %v924, 2147483648
    %v927 = vmul.f32 %v925, 1.442695
    %v928 = vpow.pop %v927
    %v929 = vmul.f32 %v926, 1.442695
    %v930 = vpow.pop %v929
    %v931 = vadd.f32 %v928, 1.0
    %v932 = vadd.f32 %v930, 1.0
    %v933 = vrcp.pop %v931
    %v934 = vmul.f32 %v931, %v933
    %v935 = vsub.f32 1.0, %v934
    %v936 = vmul.f32 %v933, %v935
    %v937 = vadd.f32 %v933, %v936
    %vm938 = vweird.f32 %v931
    %vm939 = vweird.f32 %v933
    %vm940 = vmor %vm938, %vm939
    %v941 = vsel %vm940, %v933, %v937
    %v942 = vand.u32 2147483647, %v931
    %vm943 = vcmp.eq.f32.partialorder %v942, 8.507059e+37
    %v944 = vand.u32 %v931, 2147483648
    %v945 = vor.u32 1.1754944e-38, %v944
    %v946 = vsel %vm943, %v945, %v941
    %v947 = vmul.f32 1.0, %v946
    %v948 = vrcp.pop %v932
    %v949 = vmul.f32 %v932, %v948
    %v950 = vsub.f32 1.0, %v949
    %v951 = vmul.f32 %v948, %v950
    %v952 = vadd.f32 %v948, %v951
    %vm953 = vweird.f32 %v932
    %vm954 = vweird.f32 %v948
    %vm955 = vmor %vm953, %vm954
    %v956 = vsel %vm955, %v948, %v952
    %v957 = vand.u32 2147483647, %v932
    %vm958 = vcmp.eq.f32.partialorder %v957, 8.507059e+37
    %v959 = vand.u32 %v932, 2147483648
    %v960 = vor.u32 1.1754944e-38, %v959
    %v961 = vsel %vm958, %v960, %v956
    %v962 = vmul.f32 1.0, %v961
    %v963 = vtanh.pop %v924
    %v964 = vmul.f32 %v947, %v871
    %966 = vrot.lane.b32.xlu0 %v963, 64
    %v967 = vpop.permute.xlu0 %966
    %v969 = vmul.f32 %v947, %v967
    %971 = vrot.lane.b32.xlu0 %v969, 64
    %v972 = vpop.permute.xlu0 %971
    %v974 = vadd.f32 %v964, %v972
    %v975 = vtanh.pop %v974
    %977 = vrot.lane.b32.xlu0 %v975, 64
    %v978 = vpop.permute.xlu0 %977
    %v980 = vmul.f32 %v962, %v978
    %v981 = vld [vmem:[#allocation2 + $0x60] sm:$0xff]
    %v982 = vld [vmem:[#allocation2 + $0x68] sm:$0xff]
    %v984 = vsel %vm360, %v980, 0
    %986 = vmatpush.msra.mxu0 0.0
    %987 = vmatpush.msra.mxu0 0.0
    %988 = vmatpush.msra.mxu0 0.0
    %989 = vmatpush.msra.mxu0 0.0
    %990 = vmatpush.msra.mxu0 0.0
    %991 = vmatpush.msra.mxu0 0.0
    %992 = vmatpush.msra.mxu0 0.0
    %993 = vmatpush.msra.mxu0 0.0
    %994 = vmatpush.msra.mxu0 %v354
    %995 = vmatpush.msra.mxu0 %v352
    %996 = vmatpush.msra.mxu0 %v350
    %997 = vmatpush.msra.mxu0 %v348
    %998 = vmatpush.msra.mxu0 %v346
    %999 = vmatpush.msra.mxu0 %v344
    %1000 = vmatpush.msra.mxu0 %v342
    %1001 = vmatpush.msra.mxu0 %v340
    %1002 = vmatmul.f32.gmra.mxu0 %v984
    %v1003 = vpop.f32.mrf.mxu0
    %v1004 = vadd.f32 0.0, %v1003
    %1005 = vdwg.mxu0
    %1006 = vmatpush.msra.mxu0 0.0
    %1007 = vmatpush.msra.mxu0 0.0
    %1008 = vmatpush.msra.mxu0 0.0
    %1009 = vmatpush.msra.mxu0 0.0
    %1010 = vmatpush.msra.mxu0 0.0
    %1011 = vmatpush.msra.mxu0 0.0
    %1012 = vmatpush.msra.mxu0 0.0
    %1013 = vmatpush.msra.mxu0 0.0
    %1014 = vmatpush.msra.mxu0 %v355
    %1015 = vmatpush.msra.mxu0 %v353
    %1016 = vmatpush.msra.mxu0 %v351
    %1017 = vmatpush.msra.mxu0 %v349
    %1018 = vmatpush.msra.mxu0 %v347
    %1019 = vmatpush.msra.mxu0 %v345
    %1020 = vmatpush.msra.mxu0 %v343
    %1021 = vmatpush.msra.mxu0 %v341
    %1022 = vmatmul.f32.gmra.mxu0 %v984
    %v1023 = vpop.f32.mrf.mxu0
    %v1024 = vadd.f32 0.0, %v1023
    %1025 = vdwg.mxu0
    %v1026 = vadd.f32 %v981, %v1004
    %v1027 = vadd.f32 %v982, %v1024
    %v1028 = vxor.u32 %v1026, 2147483648
    %v1029 = vxor.u32 %v1027, 2147483648
    %v1030 = vmul.f32 %v1028, 1.442695
    %v1031 = vpow.pop %v1030
    %v1032 = vmul.f32 %v1029, 1.442695
    %v1033 = vpow.pop %v1032
    %v1034 = vadd.f32 %v1031, 1.0
    %v1035 = vadd.f32 %v1033, 1.0
    %v1036 = vrcp.pop %v1034
    %v1037 = vmul.f32 %v1034, %v1036
    %v1038 = vsub.f32 1.0, %v1037
    %v1039 = vmul.f32 %v1036, %v1038
    %v1040 = vadd.f32 %v1036, %v1039
    %vm1041 = vweird.f32 %v1034
    %vm1042 = vweird.f32 %v1036
    %vm1043 = vmor %vm1041, %vm1042
    %v1044 = vsel %vm1043, %v1036, %v1040
    %v1045 = vand.u32 2147483647, %v1034
    %vm1046 = vcmp.eq.f32.partialorder %v1045, 8.507059e+37
    %v1047 = vand.u32 %v1034, 2147483648
    %v1048 = vor.u32 1.1754944e-38, %v1047
    %v1049 = vsel %vm1046, %v1048, %v1044
    %v1050 = vmul.f32 1.0, %v1049
    %v1051 = vrcp.pop %v1035
    %v1052 = vmul.f32 %v1035, %v1051
    %v1053 = vsub.f32 1.0, %v1052
    %v1054 = vmul.f32 %v1051, %v1053
    %v1055 = vadd.f32 %v1051, %v1054
    %vm1056 = vweird.f32 %v1035
    %vm1057 = vweird.f32 %v1051
    %vm1058 = vmor %vm1056, %vm1057
    %v1059 = vsel %vm1058, %v1051, %v1055
    %v1060 = vand.u32 2147483647, %v1035
    %vm1061 = vcmp.eq.f32.partialorder %v1060, 8.507059e+37
    %v1062 = vand.u32 %v1035, 2147483648
    %v1063 = vor.u32 1.1754944e-38, %v1062
    %v1064 = vsel %vm1061, %v1063, %v1059
    %v1065 = vmul.f32 1.0, %v1064
    %v1066 = vtanh.pop %v1027
    %v1067 = vmul.f32 %v1050, %v974
    %1069 = vrot.lane.b32.xlu0 %v1066, 64
    %v1070 = vpop.permute.xlu0 %1069
    %v1072 = vmul.f32 %v1050, %v1070
    %1074 = vrot.lane.b32.xlu0 %v1072, 64
    %v1075 = vpop.permute.xlu0 %1074
    %v1077 = vadd.f32 %v1067, %v1075
    %v1078 = vtanh.pop %v1077
    %1080 = vrot.lane.b32.xlu0 %v1078, 64
    %v1081 = vpop.permute.xlu0 %1080
    %v1083 = vmul.f32 %v1065, %v1081
    %v1084 = vld [vmem:[#allocation2 + $0x70] sm:$0xff]
    %v1085 = vld [vmem:[#allocation2 + $0x78] sm:$0xff]
    %v1087 = vsel %vm360, %v1083, 0
    %1089 = vmatpush.msra.mxu0 0.0
    %1090 = vmatpush.msra.mxu0 0.0
    %1091 = vmatpush.msra.mxu0 0.0
    %1092 = vmatpush.msra.mxu0 0.0
    %1093 = vmatpush.msra.mxu0 0.0
    %1094 = vmatpush.msra.mxu0 0.0
    %1095 = vmatpush.msra.mxu0 0.0
    %1096 = vmatpush.msra.mxu0 0.0
    %1097 = vmatpush.msra.mxu0 %v354
    %1098 = vmatpush.msra.mxu0 %v352
    %1099 = vmatpush.msra.mxu0 %v350
    %1100 = vmatpush.msra.mxu0 %v348
    %1101 = vmatpush.msra.mxu0 %v346
    %1102 = vmatpush.msra.mxu0 %v344
    %1103 = vmatpush.msra.mxu0 %v342
    %1104 = vmatpush.msra.mxu0 %v340
    %1105 = vmatmul.f32.gmra.mxu0 %v1087
    %v1106 = vpop.f32.mrf.mxu0
    %v1107 = vadd.f32 0.0, %v1106
    %1108 = vdwg.mxu0
    %1109 = vmatpush.msra.mxu0 0.0
    %1110 = vmatpush.msra.mxu0 0.0
    %1111 = vmatpush.msra.mxu0 0.0
    %1112 = vmatpush.msra.mxu0 0.0
    %1113 = vmatpush.msra.mxu0 0.0
    %1114 = vmatpush.msra.mxu0 0.0
    %1115 = vmatpush.msra.mxu0 0.0
    %1116 = vmatpush.msra.mxu0 0.0
    %1117 = vmatpush.msra.mxu0 %v355
    %1118 = vmatpush.msra.mxu0 %v353
    %1119 = vmatpush.msra.mxu0 %v351
    %1120 = vmatpush.msra.mxu0 %v349
    %1121 = vmatpush.msra.mxu0 %v347
    %1122 = vmatpush.msra.mxu0 %v345
    %1123 = vmatpush.msra.mxu0 %v343
    %1124 = vmatpush.msra.mxu0 %v341
    %1125 = vmatmul.f32.gmra.mxu0 %v1087
    %v1126 = vpop.f32.mrf.mxu0
    %v1127 = vadd.f32 0.0, %v1126
    %1128 = vdwg.mxu0
    %v1129 = vadd.f32 %v1084, %v1107
    %v1130 = vadd.f32 %v1085, %v1127
    %v1131 = vxor.u32 %v1129, 2147483648
    %v1132 = vxor.u32 %v1130, 2147483648
    %v1133 = vmul.f32 %v1131, 1.442695
    %v1134 = vpow.pop %v1133
    %v1135 = vmul.f32 %v1132, 1.442695
    %v1136 = vpow.pop %v1135
    %v1137 = vadd.f32 %v1134, 1.0
    %v1138 = vadd.f32 %v1136, 1.0
    %v1139 = vrcp.pop %v1137
    %v1140 = vmul.f32 %v1137, %v1139
    %v1141 = vsub.f32 1.0, %v1140
    %v1142 = vmul.f32 %v1139, %v1141
    %v1143 = vadd.f32 %v1139, %v1142
    %vm1144 = vweird.f32 %v1137
    %vm1145 = vweird.f32 %v1139
    %vm1146 = vmor %vm1144, %vm1145
    %v1147 = vsel %vm1146, %v1139, %v1143
    %v1148 = vand.u32 2147483647, %v1137
    %vm1149 = vcmp.eq.f32.partialorder %v1148, 8.507059e+37
    %v1150 = vand.u32 %v1137, 2147483648
    %v1151 = vor.u32 1.1754944e-38, %v1150
    %v1152 = vsel %vm1149, %v1151, %v1147
    %v1153 = vmul.f32 1.0, %v1152
    %v1154 = vrcp.pop %v1138
    %v1155 = vmul.f32 %v1138, %v1154
    %v1156 = vsub.f32 1.0, %v1155
    %v1157 = vmul.f32 %v1154, %v1156
    %v1158 = vadd.f32 %v1154, %v1157
    %vm1159 = vweird.f32 %v1138
    %vm1160 = vweird.f32 %v1154
    %vm1161 = vmor %vm1159, %vm1160
    %v1162 = vsel %vm1161, %v1154, %v1158
    %v1163 = vand.u32 2147483647, %v1138
    %vm1164 = vcmp.eq.f32.partialorder %v1163, 8.507059e+37
    %v1165 = vand.u32 %v1138, 2147483648
    %v1166 = vor.u32 1.1754944e-38, %v1165
    %v1167 = vsel %vm1164, %v1166, %v1162
    %v1168 = vmul.f32 1.0, %v1167
    %v1169 = vtanh.pop %v1130
    %v1170 = vmul.f32 %v1153, %v1077
    %1172 = vrot.lane.b32.xlu0 %v1169, 64
    %v1173 = vpop.permute.xlu0 %1172
    %v1175 = vmul.f32 %v1153, %v1173
    %1177 = vrot.lane.b32.xlu0 %v1175, 64
    %v1178 = vpop.permute.xlu0 %1177
    %v1180 = vadd.f32 %v1170, %v1178
    %v1181 = vtanh.pop %v1180
    %1183 = vrot.lane.b32.xlu0 %v1181, 64
    %v1184 = vpop.permute.xlu0 %1183
    %v1186 = vmul.f32 %v1168, %v1184
    %v1187 = vld [vmem:[%s8] sm:$0xff]
    %v1188 = vld [vmem:[%s8 + $0x8] sm:$0xff]
    %v1189 = vld [vmem:[%s8 + $0x10] sm:$0xff]
    %v1190 = vld [vmem:[%s8 + $0x18] sm:$0xff]
    %v1191 = vld [vmem:[%s8 + $0x20] sm:$0xff]
    %v1192 = vld [vmem:[%s8 + $0x28] sm:$0xff]
    %v1193 = vld [vmem:[%s8 + $0x30] sm:$0xff]
    %v1194 = vld [vmem:[%s8 + $0x38] sm:$0xff]
    %v1195 = vld [vmem:[%s8 + $0x40] sm:$0xff]
    %v1196 = vld [vmem:[%s8 + $0x48] sm:$0xff]
    %v1197 = vld [vmem:[%s8 + $0x50] sm:$0xff]
    %v1198 = vld [vmem:[%s8 + $0x58] sm:$0xff]
    %v1199 = vld [vmem:[%s8 + $0x60] sm:$0xff]
    %v1200 = vld [vmem:[%s8 + $0x68] sm:$0xff]
    %v1201 = vld [vmem:[%s8 + $0x70] sm:$0xff]
    %v1202 = vld [vmem:[%s8 + $0x78] sm:$0xff]
    %v1203 = vld [vmem:[%s9] sm:$0xff]
    %v1204 = vld [vmem:[%s9 + $0x8] sm:$0xff]
    %v1205 = vld [vmem:[%s9 + $0x10] sm:$0xff]
    %v1206 = vld [vmem:[%s9 + $0x18] sm:$0xff]
    %v1207 = vld [vmem:[%s9 + $0x20] sm:$0xff]
    %v1208 = vld [vmem:[%s9 + $0x28] sm:$0xff]
    %v1209 = vld [vmem:[%s9 + $0x30] sm:$0xff]
    %v1210 = vld [vmem:[%s9 + $0x38] sm:$0xff]
    %v1211 = vld [vmem:[%s9 + $0x40] sm:$0xff]
    %v1212 = vld [vmem:[%s9 + $0x48] sm:$0xff]
    %v1213 = vld [vmem:[%s9 + $0x50] sm:$0xff]
    %v1214 = vld [vmem:[%s9 + $0x58] sm:$0xff]
    %v1215 = vld [vmem:[%s9 + $0x60] sm:$0xff]
    %v1216 = vld [vmem:[%s9 + $0x68] sm:$0xff]
    %v1217 = vld [vmem:[%s9 + $0x70] sm:$0xff]
    %v1218 = vld [vmem:[%s9 + $0x78] sm:$0xff]
    %v1220 = vsel %vm360, %v1186, 0
    %1222 = vmatpush.msra.mxu0 0.0
    %1223 = vmatpush.msra.mxu0 0.0
    %1224 = vmatpush.msra.mxu0 0.0
    %1225 = vmatpush.msra.mxu0 0.0
    %1226 = vmatpush.msra.mxu0 0.0
    %1227 = vmatpush.msra.mxu0 0.0
    %1228 = vmatpush.msra.mxu0 0.0
    %1229 = vmatpush.msra.mxu0 0.0
    %1230 = vmatpush.msra.mxu0 %v1217
    %1231 = vmatpush.msra.mxu0 %v1215
    %1232 = vmatpush.msra.mxu0 %v1213
    %1233 = vmatpush.msra.mxu0 %v1211
    %1234 = vmatpush.msra.mxu0 %v1209
    %1235 = vmatpush.msra.mxu0 %v1207
    %1236 = vmatpush.msra.mxu0 %v1205
    %1237 = vmatpush.msra.mxu0 %v1203
    %1238 = vmatmul.f32.gmra.mxu0 %v1220
    %v1239 = vpop.f32.mrf.mxu0
    %v1240 = vadd.f32 0.0, %v1239
    %1241 = vmatmul.f32.gmra.mxu0 %v1087
    %v1242 = vpop.f32.mrf.mxu0
    %v1243 = vadd.f32 0.0, %v1242
    %1244 = vmatmul.f32.gmra.mxu0 %v984
    %v1245 = vpop.f32.mrf.mxu0
    %v1246 = vadd.f32 0.0, %v1245
    %1247 = vmatmul.f32.gmra.mxu0 %v881
    %v1248 = vpop.f32.mrf.mxu0
    %v1249 = vadd.f32 0.0, %v1248
    %1250 = vmatmul.f32.gmra.mxu0 %v778
    %v1251 = vpop.f32.mrf.mxu0
    %v1252 = vadd.f32 0.0, %v1251
    %1253 = vmatmul.f32.gmra.mxu0 %v675
    %v1254 = vpop.f32.mrf.mxu0
    %v1255 = vadd.f32 0.0, %v1254
    %1256 = vmatmul.f32.gmra.mxu0 %v572
    %v1257 = vpop.f32.mrf.mxu0
    %v1258 = vadd.f32 0.0, %v1257
    %1259 = vmatmul.f32.gmra.mxu0 %v469
    %v1260 = vpop.f32.mrf.mxu0
    %v1261 = vadd.f32 0.0, %v1260
    %1262 = vdwg.mxu0
    %1263 = vmatpush.msra.mxu0 0.0
    %1264 = vmatpush.msra.mxu0 0.0
    %1265 = vmatpush.msra.mxu0 0.0
    %1266 = vmatpush.msra.mxu0 0.0
    %1267 = vmatpush.msra.mxu0 0.0
    %1268 = vmatpush.msra.mxu0 0.0
    %1269 = vmatpush.msra.mxu0 0.0
    %1270 = vmatpush.msra.mxu0 0.0
    %1271 = vmatpush.msra.mxu0 %v1218
    %1272 = vmatpush.msra.mxu0 %v1216
    %1273 = vmatpush.msra.mxu0 %v1214
    %1274 = vmatpush.msra.mxu0 %v1212
    %1275 = vmatpush.msra.mxu0 %v1210
    %1276 = vmatpush.msra.mxu0 %v1208
    %1277 = vmatpush.msra.mxu0 %v1206
    %1278 = vmatpush.msra.mxu0 %v1204
    %1279 = vmatmul.f32.gmra.mxu0 %v1220
    %v1280 = vpop.f32.mrf.mxu0
    %v1281 = vadd.f32 0.0, %v1280
    %1282 = vmatmul.f32.gmra.mxu0 %v1087
    %v1283 = vpop.f32.mrf.mxu0
    %v1284 = vadd.f32 0.0, %v1283
    %1285 = vmatmul.f32.gmra.mxu0 %v984
    %v1286 = vpop.f32.mrf.mxu0
    %v1287 = vadd.f32 0.0, %v1286
    %1288 = vmatmul.f32.gmra.mxu0 %v881
    %v1289 = vpop.f32.mrf.mxu0
    %v1290 = vadd.f32 0.0, %v1289
    %1291 = vmatmul.f32.gmra.mxu0 %v778
    %v1292 = vpop.f32.mrf.mxu0
    %v1293 = vadd.f32 0.0, %v1292
    %1294 = vmatmul.f32.gmra.mxu0 %v675
    %v1295 = vpop.f32.mrf.mxu0
    %v1296 = vadd.f32 0.0, %v1295
    %1297 = vmatmul.f32.gmra.mxu0 %v572
    %v1298 = vpop.f32.mrf.mxu0
    %v1299 = vadd.f32 0.0, %v1298
    %1300 = vmatmul.f32.gmra.mxu0 %v469
    %v1301 = vpop.f32.mrf.mxu0
    %v1302 = vadd.f32 0.0, %v1301
    %1303 = vdwg.mxu0
    %1304 = vmatpush.msra.mxu0 0.0
    %1305 = vmatpush.msra.mxu0 0.0
    %1306 = vmatpush.msra.mxu0 0.0
    %1307 = vmatpush.msra.mxu0 0.0
    %1308 = vmatpush.msra.mxu0 0.0
    %1309 = vmatpush.msra.mxu0 0.0
    %1310 = vmatpush.msra.mxu0 0.0
    %1311 = vmatpush.msra.mxu0 0.0
    %1312 = vmatpush.msra.mxu0 %v1201
    %1313 = vmatpush.msra.mxu0 %v1199
    %1314 = vmatpush.msra.mxu0 %v1197
    %1315 = vmatpush.msra.mxu0 %v1195
    %1316 = vmatpush.msra.mxu0 %v1193
    %1317 = vmatpush.msra.mxu0 %v1191
    %1318 = vmatpush.msra.mxu0 %v1189
    %1319 = vmatpush.msra.mxu0 %v1187
    %1320 = vmatmul.f32.gmra.mxu0 %v469
    %v1321 = vpop.f32.mrf.mxu0
    %v1322 = vadd.f32 %v1240, %v1321
    %1323 = vmatmul.f32.gmra.mxu0 %v572
    %v1324 = vpop.f32.mrf.mxu0
    %v1325 = vadd.f32 %v1243, %v1324
    %1326 = vmatmul.f32.gmra.mxu0 %v675
    %v1327 = vpop.f32.mrf.mxu0
    %v1328 = vadd.f32 %v1246, %v1327
    %1329 = vmatmul.f32.gmra.mxu0 %v778
    %v1330 = vpop.f32.mrf.mxu0
    %v1331 = vadd.f32 %v1249, %v1330
    %1332 = vmatmul.f32.gmra.mxu0 %v881
    %v1333 = vpop.f32.mrf.mxu0
    %v1334 = vadd.f32 %v1252, %v1333
    %1335 = vmatmul.f32.gmra.mxu0 %v984
    %v1336 = vpop.f32.mrf.mxu0
    %v1337 = vadd.f32 %v1255, %v1336
    %1338 = vmatmul.f32.gmra.mxu0 %v1087
    %v1339 = vpop.f32.mrf.mxu0
    %v1340 = vadd.f32 %v1258, %v1339
    %1341 = vmatmul.f32.gmra.mxu0 %v1220
    %v1342 = vpop.f32.mrf.mxu0
    %v1343 = vadd.f32 %v1261, %v1342
    %1344 = vdwg.mxu0
    %1345 = vmatpush.msra.mxu0 0.0
    %1346 = vmatpush.msra.mxu0 0.0
    %1347 = vmatpush.msra.mxu0 0.0
    %1348 = vmatpush.msra.mxu0 0.0
    %1349 = vmatpush.msra.mxu0 0.0
    %1350 = vmatpush.msra.mxu0 0.0
    %1351 = vmatpush.msra.mxu0 0.0
    %1352 = vmatpush.msra.mxu0 0.0
    %1353 = vmatpush.msra.mxu0 %v1202
    %1354 = vmatpush.msra.mxu0 %v1200
    %1355 = vmatpush.msra.mxu0 %v1198
    %1356 = vmatpush.msra.mxu0 %v1196
    %1357 = vmatpush.msra.mxu0 %v1194
    %1358 = vmatpush.msra.mxu0 %v1192
    %1359 = vmatpush.msra.mxu0 %v1190
    %1360 = vmatpush.msra.mxu0 %v1188
    %1361 = vmatmul.f32.gmra.mxu0 %v469
    %v1362 = vpop.f32.mrf.mxu0
    %v1363 = vadd.f32 %v1281, %v1362
    %1364 = vmatmul.f32.gmra.mxu0 %v572
    %v1365 = vpop.f32.mrf.mxu0
    %v1366 = vadd.f32 %v1284, %v1365
    %1367 = vmatmul.f32.gmra.mxu0 %v675
    %v1368 = vpop.f32.mrf.mxu0
    %v1369 = vadd.f32 %v1287, %v1368
    %1370 = vmatmul.f32.gmra.mxu0 %v778
    %v1371 = vpop.f32.mrf.mxu0
    %v1372 = vadd.f32 %v1290, %v1371
    %1373 = vmatmul.f32.gmra.mxu0 %v881
    %v1374 = vpop.f32.mrf.mxu0
    %v1375 = vadd.f32 %v1293, %v1374
    %1376 = vmatmul.f32.gmra.mxu0 %v984
    %v1377 = vpop.f32.mrf.mxu0
    %v1378 = vadd.f32 %v1296, %v1377
    %1379 = vmatmul.f32.gmra.mxu0 %v1087
    %v1380 = vpop.f32.mrf.mxu0
    %v1381 = vadd.f32 %v1299, %v1380
    %1382 = vmatmul.f32.gmra.mxu0 %v1220
    %v1383 = vpop.f32.mrf.mxu0
    %v1384 = vadd.f32 %v1302, %v1383
    %1385 = vdwg.mxu0
    %v1386 = vld [vmem:[%s11] sm:$0x3]
    %v1388 = vperm.slane %v1386, 0
    %v1389 = vperm.slane %v1386, 1
    %v1392 = vadd.f32 %v1322, %v1388
    %v1393 = vadd.f32 %v1363, %v1389
    %v1394 = vadd.f32 %v1325, %v1388
    %v1395 = vadd.f32 %v1366, %v1389
    %v1396 = vadd.f32 %v1328, %v1388
    %v1397 = vadd.f32 %v1369, %v1389
    %v1398 = vadd.f32 %v1331, %v1388
    %v1399 = vadd.f32 %v1372, %v1389
    %v1400 = vadd.f32 %v1334, %v1388
    %v1401 = vadd.f32 %v1375, %v1389
    %v1402 = vadd.f32 %v1337, %v1388
    %v1403 = vadd.f32 %v1378, %v1389
    %v1404 = vadd.f32 %v1340, %v1388
    %v1405 = vadd.f32 %v1381, %v1389
    %v1406 = vadd.f32 %v1343, %v1388
    %v1407 = vadd.f32 %v1384, %v1389
    %1408 = vst [vmem:[#allocation2] sm:$0xff] %v1392
    %1409 = vst [vmem:[#allocation2 + $0x8] sm:$0xff] %v1393
    %1410 = vst [vmem:[#allocation2 + $0x10] sm:$0xff] %v1394
    %1411 = vst [vmem:[#allocation2 + $0x18] sm:$0xff] %v1395
    %1412 = vst [vmem:[#allocation2 + $0x20] sm:$0xff] %v1396
    %1413 = vst [vmem:[#allocation2 + $0x28] sm:$0xff] %v1397
    %1414 = vst [vmem:[#allocation2 + $0x30] sm:$0xff] %v1398
    %1415 = vst [vmem:[#allocation2 + $0x38] sm:$0xff] %v1399
    %1416 = vst [vmem:[#allocation2 + $0x40] sm:$0xff] %v1400
    %1417 = vst [vmem:[#allocation2 + $0x48] sm:$0xff] %v1401
    %1418 = vst [vmem:[#allocation2 + $0x50] sm:$0xff] %v1402
    %1419 = vst [vmem:[#allocation2 + $0x58] sm:$0xff] %v1403
    %1420 = vst [vmem:[#allocation2 + $0x60] sm:$0xff] %v1404
    %1421 = vst [vmem:[#allocation2 + $0x68] sm:$0xff] %v1405
    %1422 = vst [vmem:[#allocation2 + $0x70] sm:$0xff] %v1406
    %1423 = vst [vmem:[#allocation2 + $0x78] sm:$0xff] %v1407
    %v1424 = vld [vmem:[#allocation3] sm:$0xff]
    %v1425 = vld [vmem:[#allocation3 + $0x8] sm:$0xff]
    %v1426 = vld [vmem:[#allocation3 + $0x10] sm:$0xff]
    %v1427 = vld [vmem:[#allocation3 + $0x18] sm:$0xff]
    %v1428 = vld [vmem:[#allocation3 + $0x20] sm:$0xff]
    %v1429 = vld [vmem:[#allocation3 + $0x28] sm:$0xff]
    %v1430 = vld [vmem:[#allocation3 + $0x30] sm:$0xff]
    %v1431 = vld [vmem:[#allocation3 + $0x38] sm:$0xff]
    %v1432 = vld [vmem:[#allocation3 + $0x40] sm:$0xff]
    %v1433 = vld [vmem:[#allocation3 + $0x48] sm:$0xff]
    %v1434 = vld [vmem:[#allocation3 + $0x50] sm:$0xff]
    %v1435 = vld [vmem:[#allocation3 + $0x58] sm:$0xff]
    %v1436 = vld [vmem:[#allocation3 + $0x60] sm:$0xff]
    %v1437 = vld [vmem:[#allocation3 + $0x68] sm:$0xff]
    %v1438 = vld [vmem:[#allocation3 + $0x70] sm:$0xff]
    %v1439 = vld [vmem:[#allocation3 + $0x78] sm:$0xff]
    %v1440 = vld [vmem:[%s12] sm:$0xff]
    %v1441 = vld [vmem:[%s13] sm:$0xff]
    %v1442 = vld [vmem:[#allocation2] sm:$0xff]
    %v1443 = vld [vmem:[#allocation2 + $0x8] sm:$0xff]
    %v1445 = vsel %vm360, %v1440, 0
    %1447 = vmatpush.msra.mxu0 0.0
    %1448 = vmatpush.msra.mxu0 0.0
    %1449 = vmatpush.msra.mxu0 0.0
    %1450 = vmatpush.msra.mxu0 0.0
    %1451 = vmatpush.msra.mxu0 0.0
    %1452 = vmatpush.msra.mxu0 0.0
    %1453 = vmatpush.msra.mxu0 0.0
    %1454 = vmatpush.msra.mxu0 0.0
    %1455 = vmatpush.msra.mxu0 %v1438
    %1456 = vmatpush.msra.mxu0 %v1436
    %1457 = vmatpush.msra.mxu0 %v1434
    %1458 = vmatpush.msra.mxu0 %v1432
    %1459 = vmatpush.msra.mxu0 %v1430
    %1460 = vmatpush.msra.mxu0 %v1428
    %1461 = vmatpush.msra.mxu0 %v1426
    %1462 = vmatpush.msra.mxu0 %v1424
    %1463 = vmatmul.f32.gmra.mxu0 %v1445
    %v1464 = vpop.f32.mrf.mxu0
    %v1465 = vadd.f32 0.0, %v1464
    %1466 = vdwg.mxu0
    %1467 = vmatpush.msra.mxu0 0.0
    %1468 = vmatpush.msra.mxu0 0.0
    %1469 = vmatpush.msra.mxu0 0.0
    %1470 = vmatpush.msra.mxu0 0.0
    %1471 = vmatpush.msra.mxu0 0.0
    %1472 = vmatpush.msra.mxu0 0.0
    %1473 = vmatpush.msra.mxu0 0.0
    %1474 = vmatpush.msra.mxu0 0.0
    %1475 = vmatpush.msra.mxu0 %v1439
    %1476 = vmatpush.msra.mxu0 %v1437
    %1477 = vmatpush.msra.mxu0 %v1435
    %1478 = vmatpush.msra.mxu0 %v1433
    %1479 = vmatpush.msra.mxu0 %v1431
    %1480 = vmatpush.msra.mxu0 %v1429
    %1481 = vmatpush.msra.mxu0 %v1427
    %1482 = vmatpush.msra.mxu0 %v1425
    %1483 = vmatmul.f32.gmra.mxu0 %v1445
    %v1484 = vpop.f32.mrf.mxu0
    %v1485 = vadd.f32 0.0, %v1484
    %1486 = vdwg.mxu0
    %v1487 = vadd.f32 %v1442, %v1465
    %v1488 = vadd.f32 %v1443, %v1485
    %v1489 = vxor.u32 %v1487, 2147483648
    %v1490 = vxor.u32 %v1488, 2147483648
    %v1491 = vmul.f32 %v1489, 1.442695
    %v1492 = vpow.pop %v1491
    %v1493 = vmul.f32 %v1490, 1.442695
    %v1494 = vpow.pop %v1493
    %v1495 = vadd.f32 %v1492, 1.0
    %v1496 = vadd.f32 %v1494, 1.0
    %v1497 = vrcp.pop %v1495
    %v1498 = vmul.f32 %v1495, %v1497
    %v1499 = vsub.f32 1.0, %v1498
    %v1500 = vmul.f32 %v1497, %v1499
    %v1501 = vadd.f32 %v1497, %v1500
    %vm1502 = vweird.f32 %v1495
    %vm1503 = vweird.f32 %v1497
    %vm1504 = vmor %vm1502, %vm1503
    %v1505 = vsel %vm1504, %v1497, %v1501
    %v1506 = vand.u32 2147483647, %v1495
    %vm1507 = vcmp.eq.f32.partialorder %v1506, 8.507059e+37
    %v1508 = vand.u32 %v1495, 2147483648
    %v1509 = vor.u32 1.1754944e-38, %v1508
    %v1510 = vsel %vm1507, %v1509, %v1505
    %v1511 = vmul.f32 1.0, %v1510
    %v1512 = vrcp.pop %v1496
    %v1513 = vmul.f32 %v1496, %v1512
    %v1514 = vsub.f32 1.0, %v1513
    %v1515 = vmul.f32 %v1512, %v1514
    %v1516 = vadd.f32 %v1512, %v1515
    %vm1517 = vweird.f32 %v1496
    %vm1518 = vweird.f32 %v1512
    %vm1519 = vmor %vm1517, %vm1518
    %v1520 = vsel %vm1519, %v1512, %v1516
    %v1521 = vand.u32 2147483647, %v1496
    %vm1522 = vcmp.eq.f32.partialorder %v1521, 8.507059e+37
    %v1523 = vand.u32 %v1496, 2147483648
    %v1524 = vor.u32 1.1754944e-38, %v1523
    %v1525 = vsel %vm1522, %v1524, %v1520
    %v1526 = vmul.f32 1.0, %v1525
    %v1527 = vtanh.pop %v1488
    %1529 = vrot.lane.b32.xlu0 %v1441, 64
    %v1530 = vpop.permute.xlu0 %1529
    %v1532 = vmul.f32 %v1511, %v1530
    %1534 = vrot.lane.b32.xlu0 %v1527, 64
    %v1535 = vpop.permute.xlu0 %1534
    %v1537 = vmul.f32 %v1511, %v1535
    %1539 = vrot.lane.b32.xlu0 %v1537, 64
    %v1540 = vpop.permute.xlu0 %1539
    %v1542 = vadd.f32 %v1532, %v1540
    %v1543 = vtanh.pop %v1542
    %1545 = vrot.lane.b32.xlu0 %v1543, 64
    %v1546 = vpop.permute.xlu0 %1545
    %v1548 = vmul.f32 %v1526, %v1546
    %v1549 = vld [vmem:[#allocation2 + $0x10] sm:$0xff]
    %v1550 = vld [vmem:[#allocation2 + $0x18] sm:$0xff]
    %v1552 = vsel %vm360, %v1548, 0
    %1554 = vmatpush.msra.mxu0 0.0
    %1555 = vmatpush.msra.mxu0 0.0
    %1556 = vmatpush.msra.mxu0 0.0
    %1557 = vmatpush.msra.mxu0 0.0
    %1558 = vmatpush.msra.mxu0 0.0
    %1559 = vmatpush.msra.mxu0 0.0
    %1560 = vmatpush.msra.mxu0 0.0
    %1561 = vmatpush.msra.mxu0 0.0
    %1562 = vmatpush.msra.mxu0 %v1438
    %1563 = vmatpush.msra.mxu0 %v1436
    %1564 = vmatpush.msra.mxu0 %v1434
    %1565 = vmatpush.msra.mxu0 %v1432
    %1566 = vmatpush.msra.mxu0 %v1430
    %1567 = vmatpush.msra.mxu0 %v1428
    %1568 = vmatpush.msra.mxu0 %v1426
    %1569 = vmatpush.msra.mxu0 %v1424
    %1570 = vmatmul.f32.gmra.mxu0 %v1552
    %v1571 = vpop.f32.mrf.mxu0
    %v1572 = vadd.f32 0.0, %v1571
    %1573 = vdwg.mxu0
    %1574 = vmatpush.msra.mxu0 0.0
    %1575 = vmatpush.msra.mxu0 0.0
    %1576 = vmatpush.msra.mxu0 0.0
    %1577 = vmatpush.msra.mxu0 0.0
    %1578 = vmatpush.msra.mxu0 0.0
    %1579 = vmatpush.msra.mxu0 0.0
    %1580 = vmatpush.msra.mxu0 0.0
    %1581 = vmatpush.msra.mxu0 0.0
    %1582 = vmatpush.msra.mxu0 %v1439
    %1583 = vmatpush.msra.mxu0 %v1437
    %1584 = vmatpush.msra.mxu0 %v1435
    %1585 = vmatpush.msra.mxu0 %v1433
    %1586 = vmatpush.msra.mxu0 %v1431
    %1587 = vmatpush.msra.mxu0 %v1429
    %1588 = vmatpush.msra.mxu0 %v1427
    %1589 = vmatpush.msra.mxu0 %v1425
    %1590 = vmatmul.f32.gmra.mxu0 %v1552
    %v1591 = vpop.f32.mrf.mxu0
    %v1592 = vadd.f32 0.0, %v1591
    %1593 = vdwg.mxu0
    %v1594 = vadd.f32 %v1549, %v1572
    %v1595 = vadd.f32 %v1550, %v1592
    %v1596 = vxor.u32 %v1594, 2147483648
    %v1597 = vxor.u32 %v1595, 2147483648
    %v1598 = vmul.f32 %v1596, 1.442695
    %v1599 = vpow.pop %v1598
    %v1600 = vmul.f32 %v1597, 1.442695
    %v1601 = vpow.pop %v1600
    %v1602 = vadd.f32 %v1599, 1.0
    %v1603 = vadd.f32 %v1601, 1.0
    %v1604 = vrcp.pop %v1602
    %v1605 = vmul.f32 %v1602, %v1604
    %v1606 = vsub.f32 1.0, %v1605
    %v1607 = vmul.f32 %v1604, %v1606
    %v1608 = vadd.f32 %v1604, %v1607
    %vm1609 = vweird.f32 %v1602
    %vm1610 = vweird.f32 %v1604
    %vm1611 = vmor %vm1609, %vm1610
    %v1612 = vsel %vm1611, %v1604, %v1608
    %v1613 = vand.u32 2147483647, %v1602
    %vm1614 = vcmp.eq.f32.partialorder %v1613, 8.507059e+37
    %v1615 = vand.u32 %v1602, 2147483648
    %v1616 = vor.u32 1.1754944e-38, %v1615
    %v1617 = vsel %vm1614, %v1616, %v1612
    %v1618 = vmul.f32 1.0, %v1617
    %v1619 = vrcp.pop %v1603
    %v1620 = vmul.f32 %v1603, %v1619
    %v1621 = vsub.f32 1.0, %v1620
    %v1622 = vmul.f32 %v1619, %v1621
    %v1623 = vadd.f32 %v1619, %v1622
    %vm1624 = vweird.f32 %v1603
    %vm1625 = vweird.f32 %v1619
    %vm1626 = vmor %vm1624, %vm1625
    %v1627 = vsel %vm1626, %v1619, %v1623
    %v1628 = vand.u32 2147483647, %v1603
    %vm1629 = vcmp.eq.f32.partialorder %v1628, 8.507059e+37
    %v1630 = vand.u32 %v1603, 2147483648
    %v1631 = vor.u32 1.1754944e-38, %v1630
    %v1632 = vsel %vm1629, %v1631, %v1627
    %v1633 = vmul.f32 1.0, %v1632
    %v1634 = vtanh.pop %v1595
    %v1635 = vmul.f32 %v1618, %v1542
    %1637 = vrot.lane.b32.xlu0 %v1634, 64
    %v1638 = vpop.permute.xlu0 %1637
    %v1640 = vmul.f32 %v1618, %v1638
    %1642 = vrot.lane.b32.xlu0 %v1640, 64
    %v1643 = vpop.permute.xlu0 %1642
    %v1645 = vadd.f32 %v1635, %v1643
    %v1646 = vtanh.pop %v1645
    %1648 = vrot.lane.b32.xlu0 %v1646, 64
    %v1649 = vpop.permute.xlu0 %1648
    %v1651 = vmul.f32 %v1633, %v1649
    %v1652 = vld [vmem:[#allocation2 + $0x20] sm:$0xff]
    %v1653 = vld [vmem:[#allocation2 + $0x28] sm:$0xff]
    %v1655 = vsel %vm360, %v1651, 0
    %1657 = vmatpush.msra.mxu0 0.0
    %1658 = vmatpush.msra.mxu0 0.0
    %1659 = vmatpush.msra.mxu0 0.0
    %1660 = vmatpush.msra.mxu0 0.0
    %1661 = vmatpush.msra.mxu0 0.0
    %1662 = vmatpush.msra.mxu0 0.0
    %1663 = vmatpush.msra.mxu0 0.0
    %1664 = vmatpush.msra.mxu0 0.0
    %1665 = vmatpush.msra.mxu0 %v1438
    %1666 = vmatpush.msra.mxu0 %v1436
    %1667 = vmatpush.msra.mxu0 %v1434
    %1668 = vmatpush.msra.mxu0 %v1432
    %1669 = vmatpush.msra.mxu0 %v1430
    %1670 = vmatpush.msra.mxu0 %v1428
    %1671 = vmatpush.msra.mxu0 %v1426
    %1672 = vmatpush.msra.mxu0 %v1424
    %1673 = vmatmul.f32.gmra.mxu0 %v1655
    %v1674 = vpop.f32.mrf.mxu0
    %v1675 = vadd.f32 0.0, %v1674
    %1676 = vdwg.mxu0
    %1677 = vmatpush.msra.mxu0 0.0
    %1678 = vmatpush.msra.mxu0 0.0
    %1679 = vmatpush.msra.mxu0 0.0
    %1680 = vmatpush.msra.mxu0 0.0
    %1681 = vmatpush.msra.mxu0 0.0
    %1682 = vmatpush.msra.mxu0 0.0
    %1683 = vmatpush.msra.mxu0 0.0
    %1684 = vmatpush.msra.mxu0 0.0
    %1685 = vmatpush.msra.mxu0 %v1439
    %1686 = vmatpush.msra.mxu0 %v1437
    %1687 = vmatpush.msra.mxu0 %v1435
    %1688 = vmatpush.msra.mxu0 %v1433
    %1689 = vmatpush.msra.mxu0 %v1431
    %1690 = vmatpush.msra.mxu0 %v1429
    %1691 = vmatpush.msra.mxu0 %v1427
    %1692 = vmatpush.msra.mxu0 %v1425
    %1693 = vmatmul.f32.gmra.mxu0 %v1655
    %v1694 = vpop.f32.mrf.mxu0
    %v1695 = vadd.f32 0.0, %v1694
    %1696 = vdwg.mxu0
    %v1697 = vadd.f32 %v1652, %v1675
    %v1698 = vadd.f32 %v1653, %v1695
    %v1699 = vxor.u32 %v1697, 2147483648
    %v1700 = vxor.u32 %v1698, 2147483648
    %v1701 = vmul.f32 %v1699, 1.442695
    %v1702 = vpow.pop %v1701
    %v1703 = vmul.f32 %v1700, 1.442695
    %v1704 = vpow.pop %v1703
    %v1705 = vadd.f32 %v1702, 1.0
    %v1706 = vadd.f32 %v1704, 1.0
    %v1707 = vrcp.pop %v1705
    %v1708 = vmul.f32 %v1705, %v1707
    %v1709 = vsub.f32 1.0, %v1708
    %v1710 = vmul.f32 %v1707, %v1709
    %v1711 = vadd.f32 %v1707, %v1710
    %vm1712 = vweird.f32 %v1705
    %vm1713 = vweird.f32 %v1707
    %vm1714 = vmor %vm1712, %vm1713
    %v1715 = vsel %vm1714, %v1707, %v1711
    %v1716 = vand.u32 2147483647, %v1705
    %vm1717 = vcmp.eq.f32.partialorder %v1716, 8.507059e+37
    %v1718 = vand.u32 %v1705, 2147483648
    %v1719 = vor.u32 1.1754944e-38, %v1718
    %v1720 = vsel %vm1717, %v1719, %v1715
    %v1721 = vmul.f32 1.0, %v1720
    %v1722 = vrcp.pop %v1706
    %v1723 = vmul.f32 %v1706, %v1722
    %v1724 = vsub.f32 1.0, %v1723
    %v1725 = vmul.f32 %v1722, %v1724
    %v1726 = vadd.f32 %v1722, %v1725
    %vm1727 = vweird.f32 %v1706
    %vm1728 = vweird.f32 %v1722
    %vm1729 = vmor %vm1727, %vm1728
    %v1730 = vsel %vm1729, %v1722, %v1726
    %v1731 = vand.u32 2147483647, %v1706
    %vm1732 = vcmp.eq.f32.partialorder %v1731, 8.507059e+37
    %v1733 = vand.u32 %v1706, 2147483648
    %v1734 = vor.u32 1.1754944e-38, %v1733
    %v1735 = vsel %vm1732, %v1734, %v1730
    %v1736 = vmul.f32 1.0, %v1735
    %v1737 = vtanh.pop %v1698
    %v1738 = vmul.f32 %v1721, %v1645
    %1740 = vrot.lane.b32.xlu0 %v1737, 64
    %v1741 = vpop.permute.xlu0 %1740
    %v1743 = vmul.f32 %v1721, %v1741
    %1745 = vrot.lane.b32.xlu0 %v1743, 64
    %v1746 = vpop.permute.xlu0 %1745
    %v1748 = vadd.f32 %v1738, %v1746
    %v1749 = vtanh.pop %v1748
    %1751 = vrot.lane.b32.xlu0 %v1749, 64
    %v1752 = vpop.permute.xlu0 %1751
    %v1754 = vmul.f32 %v1736, %v1752
    %v1755 = vld [vmem:[#allocation2 + $0x30] sm:$0xff]
    %v1756 = vld [vmem:[#allocation2 + $0x38] sm:$0xff]
    %v1758 = vsel %vm360, %v1754, 0
    %1760 = vmatpush.msra.mxu0 0.0
    %1761 = vmatpush.msra.mxu0 0.0
    %1762 = vmatpush.msra.mxu0 0.0
    %1763 = vmatpush.msra.mxu0 0.0
    %1764 = vmatpush.msra.mxu0 0.0
    %1765 = vmatpush.msra.mxu0 0.0
    %1766 = vmatpush.msra.mxu0 0.0
    %1767 = vmatpush.msra.mxu0 0.0
    %1768 = vmatpush.msra.mxu0 %v1438
    %1769 = vmatpush.msra.mxu0 %v1436
    %1770 = vmatpush.msra.mxu0 %v1434
    %1771 = vmatpush.msra.mxu0 %v1432
    %1772 = vmatpush.msra.mxu0 %v1430
    %1773 = vmatpush.msra.mxu0 %v1428
    %1774 = vmatpush.msra.mxu0 %v1426
    %1775 = vmatpush.msra.mxu0 %v1424
    %1776 = vmatmul.f32.gmra.mxu0 %v1758
    %v1777 = vpop.f32.mrf.mxu0
    %v1778 = vadd.f32 0.0, %v1777
    %1779 = vdwg.mxu0
    %1780 = vmatpush.msra.mxu0 0.0
    %1781 = vmatpush.msra.mxu0 0.0
    %1782 = vmatpush.msra.mxu0 0.0
    %1783 = vmatpush.msra.mxu0 0.0
    %1784 = vmatpush.msra.mxu0 0.0
    %1785 = vmatpush.msra.mxu0 0.0
    %1786 = vmatpush.msra.mxu0 0.0
    %1787 = vmatpush.msra.mxu0 0.0
    %1788 = vmatpush.msra.mxu0 %v1439
    %1789 = vmatpush.msra.mxu0 %v1437
    %1790 = vmatpush.msra.mxu0 %v1435
    %1791 = vmatpush.msra.mxu0 %v1433
    %1792 = vmatpush.msra.mxu0 %v1431
    %1793 = vmatpush.msra.mxu0 %v1429
    %1794 = vmatpush.msra.mxu0 %v1427
    %1795 = vmatpush.msra.mxu0 %v1425
    %1796 = vmatmul.f32.gmra.mxu0 %v1758
    %v1797 = vpop.f32.mrf.mxu0
    %v1798 = vadd.f32 0.0, %v1797
    %1799 = vdwg.mxu0
    %v1800 = vadd.f32 %v1755, %v1778
    %v1801 = vadd.f32 %v1756, %v1798
    %v1802 = vxor.u32 %v1800, 2147483648
    %v1803 = vxor.u32 %v1801, 2147483648
    %v1804 = vmul.f32 %v1802, 1.442695
    %v1805 = vpow.pop %v1804
    %v1806 = vmul.f32 %v1803, 1.442695
    %v1807 = vpow.pop %v1806
    %v1808 = vadd.f32 %v1805, 1.0
    %v1809 = vadd.f32 %v1807, 1.0
    %v1810 = vrcp.pop %v1808
    %v1811 = vmul.f32 %v1808, %v1810
    %v1812 = vsub.f32 1.0, %v1811
    %v1813 = vmul.f32 %v1810, %v1812
    %v1814 = vadd.f32 %v1810, %v1813
    %vm1815 = vweird.f32 %v1808
    %vm1816 = vweird.f32 %v1810
    %vm1817 = vmor %vm1815, %vm1816
    %v1818 = vsel %vm1817, %v1810, %v1814
    %v1819 = vand.u32 2147483647, %v1808
    %vm1820 = vcmp.eq.f32.partialorder %v1819, 8.507059e+37
    %v1821 = vand.u32 %v1808, 2147483648
    %v1822 = vor.u32 1.1754944e-38, %v1821
    %v1823 = vsel %vm1820, %v1822, %v1818
    %v1824 = vmul.f32 1.0, %v1823
    %v1825 = vrcp.pop %v1809
    %v1826 = vmul.f32 %v1809, %v1825
    %v1827 = vsub.f32 1.0, %v1826
    %v1828 = vmul.f32 %v1825, %v1827
    %v1829 = vadd.f32 %v1825, %v1828
    %vm1830 = vweird.f32 %v1809
    %vm1831 = vweird.f32 %v1825
    %vm1832 = vmor %vm1830, %vm1831
    %v1833 = vsel %vm1832, %v1825, %v1829
    %v1834 = vand.u32 2147483647, %v1809
    %vm1835 = vcmp.eq.f32.partialorder %v1834, 8.507059e+37
    %v1836 = vand.u32 %v1809, 2147483648
    %v1837 = vor.u32 1.1754944e-38, %v1836
    %v1838 = vsel %vm1835, %v1837, %v1833
    %v1839 = vmul.f32 1.0, %v1838
    %v1840 = vtanh.pop %v1801
    %v1841 = vmul.f32 %v1824, %v1748
    %1843 = vrot.lane.b32.xlu0 %v1840, 64
    %v1844 = vpop.permute.xlu0 %1843
    %v1846 = vmul.f32 %v1824, %v1844
    %1848 = vrot.lane.b32.xlu0 %v1846, 64
    %v1849 = vpop.permute.xlu0 %1848
    %v1851 = vadd.f32 %v1841, %v1849
    %v1852 = vtanh.pop %v1851
    %1854 = vrot.lane.b32.xlu0 %v1852, 64
    %v1855 = vpop.permute.xlu0 %1854
    %v1857 = vmul.f32 %v1839, %v1855
    %v1858 = vld [vmem:[#allocation2 + $0x40] sm:$0xff]
    %v1859 = vld [vmem:[#allocation2 + $0x48] sm:$0xff]
    %v1861 = vsel %vm360, %v1857, 0
    %1863 = vmatpush.msra.mxu0 0.0
    %1864 = vmatpush.msra.mxu0 0.0
    %1865 = vmatpush.msra.mxu0 0.0
    %1866 = vmatpush.msra.mxu0 0.0
    %1867 = vmatpush.msra.mxu0 0.0
    %1868 = vmatpush.msra.mxu0 0.0
    %1869 = vmatpush.msra.mxu0 0.0
    %1870 = vmatpush.msra.mxu0 0.0
    %1871 = vmatpush.msra.mxu0 %v1438
    %1872 = vmatpush.msra.mxu0 %v1436
    %1873 = vmatpush.msra.mxu0 %v1434
    %1874 = vmatpush.msra.mxu0 %v1432
    %1875 = vmatpush.msra.mxu0 %v1430
    %1876 = vmatpush.msra.mxu0 %v1428
    %1877 = vmatpush.msra.mxu0 %v1426
    %1878 = vmatpush.msra.mxu0 %v1424
    %1879 = vmatmul.f32.gmra.mxu0 %v1861
    %v1880 = vpop.f32.mrf.mxu0
    %v1881 = vadd.f32 0.0, %v1880
    %1882 = vdwg.mxu0
    %1883 = vmatpush.msra.mxu0 0.0
    %1884 = vmatpush.msra.mxu0 0.0
    %1885 = vmatpush.msra.mxu0 0.0
    %1886 = vmatpush.msra.mxu0 0.0
    %1887 = vmatpush.msra.mxu0 0.0
    %1888 = vmatpush.msra.mxu0 0.0
    %1889 = vmatpush.msra.mxu0 0.0
    %1890 = vmatpush.msra.mxu0 0.0
    %1891 = vmatpush.msra.mxu0 %v1439
    %1892 = vmatpush.msra.mxu0 %v1437
    %1893 = vmatpush.msra.mxu0 %v1435
    %1894 = vmatpush.msra.mxu0 %v1433
    %1895 = vmatpush.msra.mxu0 %v1431
    %1896 = vmatpush.msra.mxu0 %v1429
    %1897 = vmatpush.msra.mxu0 %v1427
    %1898 = vmatpush.msra.mxu0 %v1425
    %1899 = vmatmul.f32.gmra.mxu0 %v1861
    %v1900 = vpop.f32.mrf.mxu0
    %v1901 = vadd.f32 0.0, %v1900
    %1902 = vdwg.mxu0
    %v1903 = vadd.f32 %v1858, %v1881
    %v1904 = vadd.f32 %v1859, %v1901
    %v1905 = vxor.u32 %v1903, 2147483648
    %v1906 = vxor.u32 %v1904, 2147483648
    %v1907 = vmul.f32 %v1905, 1.442695
    %v1908 = vpow.pop %v1907
    %v1909 = vmul.f32 %v1906, 1.442695
    %v1910 = vpow.pop %v1909
    %v1911 = vadd.f32 %v1908, 1.0
    %v1912 = vadd.f32 %v1910, 1.0
    %v1913 = vrcp.pop %v1911
    %v1914 = vmul.f32 %v1911, %v1913
    %v1915 = vsub.f32 1.0, %v1914
    %v1916 = vmul.f32 %v1913, %v1915
    %v1917 = vadd.f32 %v1913, %v1916
    %vm1918 = vweird.f32 %v1911
    %vm1919 = vweird.f32 %v1913
    %vm1920 = vmor %vm1918, %vm1919
    %v1921 = vsel %vm1920, %v1913, %v1917
    %v1922 = vand.u32 2147483647, %v1911
    %vm1923 = vcmp.eq.f32.partialorder %v1922, 8.507059e+37
    %v1924 = vand.u32 %v1911, 2147483648
    %v1925 = vor.u32 1.1754944e-38, %v1924
    %v1926 = vsel %vm1923, %v1925, %v1921
    %v1927 = vmul.f32 1.0, %v1926
    %v1928 = vrcp.pop %v1912
    %v1929 = vmul.f32 %v1912, %v1928
    %v1930 = vsub.f32 1.0, %v1929
    %v1931 = vmul.f32 %v1928, %v1930
    %v1932 = vadd.f32 %v1928, %v1931
    %vm1933 = vweird.f32 %v1912
    %vm1934 = vweird.f32 %v1928
    %vm1935 = vmor %vm1933, %vm1934
    %v1936 = vsel %vm1935, %v1928, %v1932
    %v1937 = vand.u32 2147483647, %v1912
    %vm1938 = vcmp.eq.f32.partialorder %v1937, 8.507059e+37
    %v1939 = vand.u32 %v1912, 2147483648
    %v1940 = vor.u32 1.1754944e-38, %v1939
    %v1941 = vsel %vm1938, %v1940, %v1936
    %v1942 = vmul.f32 1.0, %v1941
    %v1943 = vtanh.pop %v1904
    %v1944 = vmul.f32 %v1927, %v1851
    %1946 = vrot.lane.b32.xlu0 %v1943, 64
    %v1947 = vpop.permute.xlu0 %1946
    %v1949 = vmul.f32 %v1927, %v1947
    %1951 = vrot.lane.b32.xlu0 %v1949, 64
    %v1952 = vpop.permute.xlu0 %1951
    %v1954 = vadd.f32 %v1944, %v1952
    %v1955 = vtanh.pop %v1954
    %1957 = vrot.lane.b32.xlu0 %v1955, 64
    %v1958 = vpop.permute.xlu0 %1957
    %v1960 = vmul.f32 %v1942, %v1958
    %v1961 = vld [vmem:[#allocation2 + $0x50] sm:$0xff]
    %v1962 = vld [vmem:[#allocation2 + $0x58] sm:$0xff]
    %v1964 = vsel %vm360, %v1960, 0
    %1966 = vmatpush.msra.mxu0 0.0
    %1967 = vmatpush.msra.mxu0 0.0
    %1968 = vmatpush.msra.mxu0 0.0
    %1969 = vmatpush.msra.mxu0 0.0
    %1970 = vmatpush.msra.mxu0 0.0
    %1971 = vmatpush.msra.mxu0 0.0
    %1972 = vmatpush.msra.mxu0 0.0
    %1973 = vmatpush.msra.mxu0 0.0
    %1974 = vmatpush.msra.mxu0 %v1438
    %1975 = vmatpush.msra.mxu0 %v1436
    %1976 = vmatpush.msra.mxu0 %v1434
    %1977 = vmatpush.msra.mxu0 %v1432
    %1978 = vmatpush.msra.mxu0 %v1430
    %1979 = vmatpush.msra.mxu0 %v1428
    %1980 = vmatpush.msra.mxu0 %v1426
    %1981 = vmatpush.msra.mxu0 %v1424
    %1982 = vmatmul.f32.gmra.mxu0 %v1964
    %v1983 = vpop.f32.mrf.mxu0
    %v1984 = vadd.f32 0.0, %v1983
    %1985 = vdwg.mxu0
    %1986 = vmatpush.msra.mxu0 0.0
    %1987 = vmatpush.msra.mxu0 0.0
    %1988 = vmatpush.msra.mxu0 0.0
    %1989 = vmatpush.msra.mxu0 0.0
    %1990 = vmatpush.msra.mxu0 0.0
    %1991 = vmatpush.msra.mxu0 0.0
    %1992 = vmatpush.msra.mxu0 0.0
    %1993 = vmatpush.msra.mxu0 0.0
    %1994 = vmatpush.msra.mxu0 %v1439
    %1995 = vmatpush.msra.mxu0 %v1437
    %1996 = vmatpush.msra.mxu0 %v1435
    %1997 = vmatpush.msra.mxu0 %v1433
    %1998 = vmatpush.msra.mxu0 %v1431
    %1999 = vmatpush.msra.mxu0 %v1429
    %2000 = vmatpush.msra.mxu0 %v1427
    %2001 = vmatpush.msra.mxu0 %v1425
    %2002 = vmatmul.f32.gmra.mxu0 %v1964
    %v2003 = vpop.f32.mrf.mxu0
    %v2004 = vadd.f32 0.0, %v2003
    %2005 = vdwg.mxu0
    %v2006 = vadd.f32 %v1961, %v1984
    %v2007 = vadd.f32 %v1962, %v2004
    %v2008 = vxor.u32 %v2006, 2147483648
    %v2009 = vxor.u32 %v2007, 2147483648
    %v2010 = vmul.f32 %v2008, 1.442695
    %v2011 = vpow.pop %v2010
    %v2012 = vmul.f32 %v2009, 1.442695
    %v2013 = vpow.pop %v2012
    %v2014 = vadd.f32 %v2011, 1.0
    %v2015 = vadd.f32 %v2013, 1.0
    %v2016 = vrcp.pop %v2014
    %v2017 = vmul.f32 %v2014, %v2016
    %v2018 = vsub.f32 1.0, %v2017
    %v2019 = vmul.f32 %v2016, %v2018
    %v2020 = vadd.f32 %v2016, %v2019
    %vm2021 = vweird.f32 %v2014
    %vm2022 = vweird.f32 %v2016
    %vm2023 = vmor %vm2021, %vm2022
    %v2024 = vsel %vm2023, %v2016, %v2020
    %v2025 = vand.u32 2147483647, %v2014
    %vm2026 = vcmp.eq.f32.partialorder %v2025, 8.507059e+37
    %v2027 = vand.u32 %v2014, 2147483648
    %v2028 = vor.u32 1.1754944e-38, %v2027
    %v2029 = vsel %vm2026, %v2028, %v2024
    %v2030 = vmul.f32 1.0, %v2029
    %v2031 = vrcp.pop %v2015
    %v2032 = vmul.f32 %v2015, %v2031
    %v2033 = vsub.f32 1.0, %v2032
    %v2034 = vmul.f32 %v2031, %v2033
    %v2035 = vadd.f32 %v2031, %v2034
    %vm2036 = vweird.f32 %v2015
    %vm2037 = vweird.f32 %v2031
    %vm2038 = vmor %vm2036, %vm2037
    %v2039 = vsel %vm2038, %v2031, %v2035
    %v2040 = vand.u32 2147483647, %v2015
    %vm2041 = vcmp.eq.f32.partialorder %v2040, 8.507059e+37
    %v2042 = vand.u32 %v2015, 2147483648
    %v2043 = vor.u32 1.1754944e-38, %v2042
    %v2044 = vsel %vm2041, %v2043, %v2039
    %v2045 = vmul.f32 1.0, %v2044
    %v2046 = vtanh.pop %v2007
    %v2047 = vmul.f32 %v2030, %v1954
    %2049 = vrot.lane.b32.xlu0 %v2046, 64
    %v2050 = vpop.permute.xlu0 %2049
    %v2052 = vmul.f32 %v2030, %v2050
    %2054 = vrot.lane.b32.xlu0 %v2052, 64
    %v2055 = vpop.permute.xlu0 %2054
    %v2057 = vadd.f32 %v2047, %v2055
    %v2058 = vtanh.pop %v2057
    %2060 = vrot.lane.b32.xlu0 %v2058, 64
    %v2061 = vpop.permute.xlu0 %2060
    %v2063 = vmul.f32 %v2045, %v2061
    %v2064 = vld [vmem:[#allocation2 + $0x60] sm:$0xff]
    %v2065 = vld [vmem:[#allocation2 + $0x68] sm:$0xff]
    %v2067 = vsel %vm360, %v2063, 0
    %2069 = vmatpush.msra.mxu0 0.0
    %2070 = vmatpush.msra.mxu0 0.0
    %2071 = vmatpush.msra.mxu0 0.0
    %2072 = vmatpush.msra.mxu0 0.0
    %2073 = vmatpush.msra.mxu0 0.0
    %2074 = vmatpush.msra.mxu0 0.0
    %2075 = vmatpush.msra.mxu0 0.0
    %2076 = vmatpush.msra.mxu0 0.0
    %2077 = vmatpush.msra.mxu0 %v1438
    %2078 = vmatpush.msra.mxu0 %v1436
    %2079 = vmatpush.msra.mxu0 %v1434
    %2080 = vmatpush.msra.mxu0 %v1432
    %2081 = vmatpush.msra.mxu0 %v1430
    %2082 = vmatpush.msra.mxu0 %v1428
    %2083 = vmatpush.msra.mxu0 %v1426
    %2084 = vmatpush.msra.mxu0 %v1424
    %2085 = vmatmul.f32.gmra.mxu0 %v2067
    %v2086 = vpop.f32.mrf.mxu0
    %v2087 = vadd.f32 0.0, %v2086
    %2088 = vdwg.mxu0
    %2089 = vmatpush.msra.mxu0 0.0
    %2090 = vmatpush.msra.mxu0 0.0
    %2091 = vmatpush.msra.mxu0 0.0
    %2092 = vmatpush.msra.mxu0 0.0
    %2093 = vmatpush.msra.mxu0 0.0
    %2094 = vmatpush.msra.mxu0 0.0
    %2095 = vmatpush.msra.mxu0 0.0
    %2096 = vmatpush.msra.mxu0 0.0
    %2097 = vmatpush.msra.mxu0 %v1439
    %2098 = vmatpush.msra.mxu0 %v1437
    %2099 = vmatpush.msra.mxu0 %v1435
    %2100 = vmatpush.msra.mxu0 %v1433
    %2101 = vmatpush.msra.mxu0 %v1431
    %2102 = vmatpush.msra.mxu0 %v1429
    %2103 = vmatpush.msra.mxu0 %v1427
    %2104 = vmatpush.msra.mxu0 %v1425
    %2105 = vmatmul.f32.gmra.mxu0 %v2067
    %v2106 = vpop.f32.mrf.mxu0
    %v2107 = vadd.f32 0.0, %v2106
    %2108 = vdwg.mxu0
    %v2109 = vadd.f32 %v2064, %v2087
    %v2110 = vadd.f32 %v2065, %v2107
    %v2111 = vxor.u32 %v2109, 2147483648
    %v2112 = vxor.u32 %v2110, 2147483648
    %v2113 = vmul.f32 %v2111, 1.442695
    %v2114 = vpow.pop %v2113
    %v2115 = vmul.f32 %v2112, 1.442695
    %v2116 = vpow.pop %v2115
    %v2117 = vadd.f32 %v2114, 1.0
    %v2118 = vadd.f32 %v2116, 1.0
    %v2119 = vrcp.pop %v2117
    %v2120 = vmul.f32 %v2117, %v2119
    %v2121 = vsub.f32 1.0, %v2120
    %v2122 = vmul.f32 %v2119, %v2121
    %v2123 = vadd.f32 %v2119, %v2122
    %vm2124 = vweird.f32 %v2117
    %vm2125 = vweird.f32 %v2119
    %vm2126 = vmor %vm2124, %vm2125
    %v2127 = vsel %vm2126, %v2119, %v2123
    %v2128 = vand.u32 2147483647, %v2117
    %vm2129 = vcmp.eq.f32.partialorder %v2128, 8.507059e+37
    %v2130 = vand.u32 %v2117, 2147483648
    %v2131 = vor.u32 1.1754944e-38, %v2130
    %v2132 = vsel %vm2129, %v2131, %v2127
    %v2133 = vmul.f32 1.0, %v2132
    %v2134 = vrcp.pop %v2118
    %v2135 = vmul.f32 %v2118, %v2134
    %v2136 = vsub.f32 1.0, %v2135
    %v2137 = vmul.f32 %v2134, %v2136
    %v2138 = vadd.f32 %v2134, %v2137
    %vm2139 = vweird.f32 %v2118
    %vm2140 = vweird.f32 %v2134
    %vm2141 = vmor %vm2139, %vm2140
    %v2142 = vsel %vm2141, %v2134, %v2138
    %v2143 = vand.u32 2147483647, %v2118
    %vm2144 = vcmp.eq.f32.partialorder %v2143, 8.507059e+37
    %v2145 = vand.u32 %v2118, 2147483648
    %v2146 = vor.u32 1.1754944e-38, %v2145
    %v2147 = vsel %vm2144, %v2146, %v2142
    %v2148 = vmul.f32 1.0, %v2147
    %v2149 = vtanh.pop %v2110
    %v2150 = vmul.f32 %v2133, %v2057
    %2152 = vrot.lane.b32.xlu0 %v2149, 64
    %v2153 = vpop.permute.xlu0 %2152
    %v2155 = vmul.f32 %v2133, %v2153
    %2157 = vrot.lane.b32.xlu0 %v2155, 64
    %v2158 = vpop.permute.xlu0 %2157
    %v2160 = vadd.f32 %v2150, %v2158
    %v2161 = vtanh.pop %v2160
    %2163 = vrot.lane.b32.xlu0 %v2161, 64
    %v2164 = vpop.permute.xlu0 %2163
    %v2166 = vmul.f32 %v2148, %v2164
    %v2167 = vld [vmem:[#allocation2 + $0x70] sm:$0xff]
    %v2168 = vld [vmem:[#allocation2 + $0x78] sm:$0xff]
    %v2170 = vsel %vm360, %v2166, 0
    %2172 = vmatpush.msra.mxu0 0.0
    %2173 = vmatpush.msra.mxu0 0.0
    %2174 = vmatpush.msra.mxu0 0.0
    %2175 = vmatpush.msra.mxu0 0.0
    %2176 = vmatpush.msra.mxu0 0.0
    %2177 = vmatpush.msra.mxu0 0.0
    %2178 = vmatpush.msra.mxu0 0.0
    %2179 = vmatpush.msra.mxu0 0.0
    %2180 = vmatpush.msra.mxu0 %v1438
    %2181 = vmatpush.msra.mxu0 %v1436
    %2182 = vmatpush.msra.mxu0 %v1434
    %2183 = vmatpush.msra.mxu0 %v1432
    %2184 = vmatpush.msra.mxu0 %v1430
    %2185 = vmatpush.msra.mxu0 %v1428
    %2186 = vmatpush.msra.mxu0 %v1426
    %2187 = vmatpush.msra.mxu0 %v1424
    %2188 = vmatmul.f32.gmra.mxu0 %v2170
    %v2189 = vpop.f32.mrf.mxu0
    %v2190 = vadd.f32 0.0, %v2189
    %2191 = vdwg.mxu0
    %2192 = vmatpush.msra.mxu0 0.0
    %2193 = vmatpush.msra.mxu0 0.0
    %2194 = vmatpush.msra.mxu0 0.0
    %2195 = vmatpush.msra.mxu0 0.0
    %2196 = vmatpush.msra.mxu0 0.0
    %2197 = vmatpush.msra.mxu0 0.0
    %2198 = vmatpush.msra.mxu0 0.0
    %2199 = vmatpush.msra.mxu0 0.0
    %2200 = vmatpush.msra.mxu0 %v1439
    %2201 = vmatpush.msra.mxu0 %v1437
    %2202 = vmatpush.msra.mxu0 %v1435
    %2203 = vmatpush.msra.mxu0 %v1433
    %2204 = vmatpush.msra.mxu0 %v1431
    %2205 = vmatpush.msra.mxu0 %v1429
    %2206 = vmatpush.msra.mxu0 %v1427
    %2207 = vmatpush.msra.mxu0 %v1425
    %2208 = vmatmul.f32.gmra.mxu0 %v2170
    %v2209 = vpop.f32.mrf.mxu0
    %v2210 = vadd.f32 0.0, %v2209
    %2211 = vdwg.mxu0
    %v2212 = vadd.f32 %v2167, %v2190
    %v2213 = vadd.f32 %v2168, %v2210
    %v2214 = vxor.u32 %v2212, 2147483648
    %v2215 = vxor.u32 %v2213, 2147483648
    %v2216 = vmul.f32 %v2214, 1.442695
    %v2217 = vpow.pop %v2216
    %v2218 = vmul.f32 %v2215, 1.442695
    %v2219 = vpow.pop %v2218
    %v2220 = vadd.f32 %v2217, 1.0
    %v2221 = vadd.f32 %v2219, 1.0
    %v2222 = vrcp.pop %v2220
    %v2223 = vmul.f32 %v2220, %v2222
    %v2224 = vsub.f32 1.0, %v2223
    %v2225 = vmul.f32 %v2222, %v2224
    %v2226 = vadd.f32 %v2222, %v2225
    %vm2227 = vweird.f32 %v2220
    %vm2228 = vweird.f32 %v2222
    %vm2229 = vmor %vm2227, %vm2228
    %v2230 = vsel %vm2229, %v2222, %v2226
    %v2231 = vand.u32 2147483647, %v2220
    %vm2232 = vcmp.eq.f32.partialorder %v2231, 8.507059e+37
    %v2233 = vand.u32 %v2220, 2147483648
    %v2234 = vor.u32 1.1754944e-38, %v2233
    %v2235 = vsel %vm2232, %v2234, %v2230
    %v2236 = vmul.f32 1.0, %v2235
    %v2237 = vrcp.pop %v2221
    %v2238 = vmul.f32 %v2221, %v2237
    %v2239 = vsub.f32 1.0, %v2238
    %v2240 = vmul.f32 %v2237, %v2239
    %v2241 = vadd.f32 %v2237, %v2240
    %vm2242 = vweird.f32 %v2221
    %vm2243 = vweird.f32 %v2237
    %vm2244 = vmor %vm2242, %vm2243
    %v2245 = vsel %vm2244, %v2237, %v2241
    %v2246 = vand.u32 2147483647, %v2221
    %vm2247 = vcmp.eq.f32.partialorder %v2246, 8.507059e+37
    %v2248 = vand.u32 %v2221, 2147483648
    %v2249 = vor.u32 1.1754944e-38, %v2248
    %v2250 = vsel %vm2247, %v2249, %v2245
    %v2251 = vmul.f32 1.0, %v2250
    %v2252 = vtanh.pop %v2213
    %v2253 = vmul.f32 %v2236, %v2160
    %2255 = vrot.lane.b32.xlu0 %v2252, 64
    %v2256 = vpop.permute.xlu0 %2255
    %v2258 = vmul.f32 %v2236, %v2256
    %2260 = vrot.lane.b32.xlu0 %v2258, 64
    %v2261 = vpop.permute.xlu0 %2260
    %v2263 = vadd.f32 %v2253, %v2261
    %v2264 = vtanh.pop %v2263
    %2266 = vrot.lane.b32.xlu0 %v2264, 64
    %v2267 = vpop.permute.xlu0 %2266
    %v2269 = vmul.f32 %v2251, %v2267
    %2270 = vrot.lane.b32.xlu0 %v1548, 96
    %v2271 = vpop.permute.xlu0 %2270
    %v2273 = vadd.f32 %v2269, %v2271
    %v2274 = vmul.f32 %v2273, 0.5
    %v2275 = vld [vmem:[%s14] sm:$0xff]
    %v2276 = vld [vmem:[%s14 + $0x8] sm:$0xff]
    %v2277 = vld [vmem:[%s14 + $0x10] sm:$0xff]
    %v2278 = vld [vmem:[%s14 + $0x18] sm:$0xff]
    %v2279 = vld [vmem:[%s15] sm:$0x1]
    %v2281 = vperm.slane %v2279, 0
    %vm2283 = vcmask 261120
    %v2285 = vsel %vm2283, %v2274, 0
    %2287 = vmatpush.msra.mxu0 0.0
    %2288 = vmatpush.msra.mxu0 0.0
    %2289 = vmatpush.msra.mxu0 0.0
    %2290 = vmatpush.msra.mxu0 0.0
    %2291 = vmatpush.msra.mxu0 0.0
    %2292 = vmatpush.msra.mxu0 0.0
    %2293 = vmatpush.msra.mxu0 0.0
    %2294 = vmatpush.msra.mxu0 0.0
    %2295 = vmatpush.msra.mxu0 0.0
    %2296 = vmatpush.msra.mxu0 0.0
    %2297 = vmatpush.msra.mxu0 0.0
    %2298 = vmatpush.msra.mxu0 0.0
    %2299 = vmatpush.msra.mxu0 %v2278
    %2300 = vmatpush.msra.mxu0 %v2277
    %2301 = vmatpush.msra.mxu0 %v2276
    %2302 = vmatpush.msra.mxu0 %v2275
    %2303 = vmatmul.f32.gmra.mxu0 %v2285
    %v2304 = vpop.f32.mrf.mxu0
    %v2305 = vadd.f32 %v2281, %v2304
    %2306 = vdwg.mxu0
    %vm2307 = vcmask 31744
    %2308 = vst.msk [vmem:[%s16] sm:$0xff] %vm2307, %v2305
    // Predicated region
    $region70: #{bilstm_forward.1} parent=1 // pred_check
      _
    $region71: #{bilstm_forward.1} parent=1 // pred_check_branch
      %2310 = sbr.rel (0) target = $region73
    $region72: #{bilstm_forward.1} parent=1 // pred_region
      _
    $region73: #{bilstm_forward.1} parent=1 // pred_fallthru
      _
    // Predicated region
    $region74: #{bilstm_forward.1} parent=1 // pred_check
      _
    $region75: #{bilstm_forward.1} parent=1 // pred_check_branch
      %2312 = sbr.rel (0) target = $region77
    $region76: #{bilstm_forward.1} parent=1 // pred_region
      _
    $region77: #{bilstm_forward.1} parent=1 // pred_fallthru
      _
    %2313 = vsyncpa [#allocation4], 1

</llo_original>
